<compile_context>
chip_gen: v5e
topology: v5e:2x2
jax: 0.10.0
libtpu: 0.0.40
codegen_flags: <defaults>
</compile_context>

<pallas_src>
import jax
import jax.numpy as jnp
from jax.experimental import pallas as pl
from jax.experimental.pallas import tpu as pltpu

LANE = 128


def actor_mlp_kernel(x_ref,
                     w1_ref, b1_ref,
                     w2_ref, b2_ref,
                     w3_ref, b3_ref,
                     w4_ref, b4_ref,
                     w5_ref, b5_ref,
                     o_ref):
    def dense(h_f32, w_ref, b_ref, relu):
        # bf16 x bf16 on the MXU, f32 accumulation; bias/ReLU in f32 on the
        # accumulator.
        h = jnp.dot(h_f32.astype(jnp.bfloat16), w_ref[...],
                    preferred_element_type=jnp.float32) + b_ref[...]
        return jnp.maximum(h, 0.0) if relu else h

    h = x_ref[...]
    h = dense(h, w1_ref, b1_ref, True)
    h = dense(h, w2_ref, b2_ref, True)
    h = dense(h, w3_ref, b3_ref, True)
    h = dense(h, w4_ref, b4_ref, True)
    h = dense(h, w5_ref, b5_ref, False)
    o_ref[...] = h.astype(o_ref.dtype)


def prepare_params(params):
    """One-time param prep: pad the final layer's output dim up to a multiple
    of 128 so the kernel's output store is lane-dense (unmasked vst).
    Returns (prepared_params, act_dim)."""
    act_dim = params[-1][0].shape[1]
    out_pad = ((act_dim + LANE - 1) // LANE) * LANE
    w5, b5 = params[-1]
    w5p = jnp.zeros((w5.shape[0], out_pad), w5.dtype).at[:, :act_dim].set(w5)
    b5p = jnp.zeros((1, out_pad), b5.dtype).at[:, :act_dim].set(b5)
    return list(params[:-1]) + [(w5p, b5p)], act_dim


def actor_forward(x, prepared_params, act_dim, tm=512):
    """x: (B, obs_dim) f32.  prepared_params: output of prepare_params."""
    B, obs_dim = x.shape
    out_pad = prepared_params[-1][0].shape[1]

    # Batch tiling: always >= 2 grid steps (megacore on v7x), tile rows padded
    # up to a multiple of 8 (sublane rule).  Weights are fetched once per core.
    n_tiles = max(2, pl.cdiv(B, tm))
    tm_eff = ((pl.cdiv(B, n_tiles) + 7) // 8) * 8
    Bp = n_tiles * tm_eff
    xp = x if Bp == B else jnp.pad(x, ((0, Bp - B), (0, 0)))

    flat = [xp]
    in_specs = [pl.BlockSpec((tm_eff, obs_dim), lambda i: (i, 0))]
    for (w, b) in prepared_params:
        flat.extend([w, b])
        # Constant block index -> DMA'd once, VMEM-resident across batch tiles.
        in_specs.append(pl.BlockSpec(w.shape, lambda i: (0, 0)))
        in_specs.append(pl.BlockSpec(b.shape, lambda i: (0, 0)))

    flops = 2 * Bp * sum(int(w.shape[0]) * int(w.shape[1])
                         for w, _ in prepared_params)
    bytes_accessed = (
        xp.size * xp.dtype.itemsize
        + Bp * out_pad * 4
        + sum(w.size * w.dtype.itemsize + b.size * b.dtype.itemsize
              for w, b in prepared_params))

    out = pl.pallas_call(
        actor_mlp_kernel,
        out_shape=jax.ShapeDtypeStruct((Bp, out_pad), jnp.float32),
        grid=(n_tiles,),
        in_specs=in_specs,
        out_specs=pl.BlockSpec((tm_eff, out_pad), lambda i: (i, 0)),
        compiler_params=pltpu.CompilerParams(
            dimension_semantics=("parallel",),
            vmem_limit_bytes=32 << 20),
        cost_estimate=pl.CostEstimate(
            flops=flops, transcendentals=0, bytes_accessed=bytes_accessed),
    )(*flat)
    return out[:B, :act_dim]


def init_params(key, obs_dim, act_dim):
    """nn.Linear-style init (U[-1/sqrt(fan_in), 1/sqrt(fan_in)]); weights bf16,
    biases f32."""
    dims = [obs_dim, 1024, 512, 256, 128, act_dim]
    params = []
    for i in range(len(dims) - 1):
        fan_in, fan_out = dims[i], dims[i + 1]
        key, kw, kb = jax.random.split(key, 3)
        bound = 1.0 / (fan_in ** 0.5)
        w = jax.random.uniform(kw, (fan_in, fan_out), jnp.float32, -bound, bound)
        b = jax.random.uniform(kb, (1, fan_out), jnp.float32, -bound, bound)
        params.append((w.astype(jnp.bfloat16), b))
    return params


def reference_forward(x, params):
    """Pure-JAX reference with the same mixed-precision contract as the kernel:
    bf16 activations x bf16 weights, f32 accumulation, f32 bias/ReLU."""
    h = x
    for i, (w, b) in enumerate(params):
        h = jnp.dot(h.astype(jnp.bfloat16), w,
                    preferred_element_type=jnp.float32) + b
        if i < len(params) - 1:
            h = jnp.maximum(h, 0.0)
    return h


if __name__ == "__main__":
    obs_dim = 8        # flat observation, e.g. LunarLander-style
    act_dim = 4
    batch = 2

    key = jax.random.PRNGKey(0)
    key, kx = jax.random.split(key)
    x = jax.random.normal(kx, (batch, obs_dim), jnp.float32)
    params = init_params(key, obs_dim, act_dim)

    prepared, act_dim_out = prepare_params(params)   # one-time prep
    out = actor_forward(x, prepared, act_dim_out)
    out = jax.block_until_ready(out)

    ref = reference_forward(x, params)
    assert out.shape == (batch, act_dim)
    assert jnp.allclose(out, ref, atol=1e-2, rtol=1e-2), "mismatch vs reference"

    print("KERNEL_OK")
</pallas_src>

<mosaic_0001>
module attributes {stable_mosaic.version = 11 : i64} {
  func.func @actor_mlp_kernel(%arg0: i32, %arg1: memref<8x8xf32, #tpu.memory_space<vmem>>, %arg2: memref<8x1024xbf16, #tpu.memory_space<vmem>>, %arg3: memref<1x1024xf32, #tpu.memory_space<vmem>>, %arg4: memref<1024x512xbf16, #tpu.memory_space<vmem>>, %arg5: memref<1x512xf32, #tpu.memory_space<vmem>>, %arg6: memref<512x256xbf16, #tpu.memory_space<vmem>>, %arg7: memref<1x256xf32, #tpu.memory_space<vmem>>, %arg8: memref<256x128xbf16, #tpu.memory_space<vmem>>, %arg9: memref<1x128xf32, #tpu.memory_space<vmem>>, %arg10: memref<128x128xbf16, #tpu.memory_space<vmem>>, %arg11: memref<1x128xf32, #tpu.memory_space<vmem>>, %arg12: memref<8x128xf32, #tpu.memory_space<vmem>>) attributes {dimension_semantics = [#tpu.dimension_semantics<parallel>], iteration_bounds = array<i64: 2>, scalar_prefetch = 0 : i64, scratch_operands = 0 : i64, tpu.core_type = #tpu.core_type<tc>, window_params = [{transform_indices = @transform_0, window_bounds = array<i64: 8, 8>}, {pipeline_mode = #tpu.pipeline_mode<synchronous>, transform_indices = @transform_1, window_bounds = array<i64: 8, 1024>}, {pipeline_mode = #tpu.pipeline_mode<synchronous>, transform_indices = @transform_2, window_bounds = array<i64: 1, 1024>}, {pipeline_mode = #tpu.pipeline_mode<synchronous>, transform_indices = @transform_3, window_bounds = array<i64: 1024, 512>}, {pipeline_mode = #tpu.pipeline_mode<synchronous>, transform_indices = @transform_4, window_bounds = array<i64: 1, 512>}, {pipeline_mode = #tpu.pipeline_mode<synchronous>, transform_indices = @transform_5, window_bounds = array<i64: 512, 256>}, {pipeline_mode = #tpu.pipeline_mode<synchronous>, transform_indices = @transform_6, window_bounds = array<i64: 1, 256>}, {pipeline_mode = #tpu.pipeline_mode<synchronous>, transform_indices = @transform_7, window_bounds = array<i64: 256, 128>}, {pipeline_mode = #tpu.pipeline_mode<synchronous>, transform_indices = @transform_8, window_bounds = array<i64: 1, 128>}, {pipeline_mode = #tpu.pipeline_mode<synchronous>, transform_indices = @transform_9, window_bounds = array<i64: 128, 128>}, {pipeline_mode = #tpu.pipeline_mode<synchronous>, transform_indices = @transform_10, window_bounds = array<i64: 1, 128>}, {transform_indices = @transform_11, window_bounds = array<i64: 8, 128>}]} {
    %c0 = arith.constant 0 : index
    %c0_0 = arith.constant 0 : index
    %0 = vector.load %arg1[%c0, %c0_0] : memref<8x8xf32, #tpu.memory_space<vmem>>, vector<8x8xf32>
    %1 = arith.truncf %0 : vector<8x8xf32> to vector<8x8xbf16>
    %c0_1 = arith.constant 0 : index
    %c0_2 = arith.constant 0 : index
    %2 = vector.load %arg2[%c0_1, %c0_2] : memref<8x1024xbf16, #tpu.memory_space<vmem>>, vector<8x1024xbf16>
    %cst = arith.constant dense<0.000000e+00> : vector<8x1024xf32>
    %3 = tpu.matmul %1, %2, %cst {dimension_numbers = #tpu.dot_dimension_numbers<[1], [0], [0], [1], [0, 0, 1, 1], [], []>} : vector<8x8xbf16>, vector<8x1024xbf16>, vector<8x1024xf32> -> vector<8x1024xf32>
    %c0_3 = arith.constant 0 : index
    %c0_4 = arith.constant 0 : index
    %4 = vector.load %arg3[%c0_3, %c0_4] : memref<1x1024xf32, #tpu.memory_space<vmem>>, vector<1x1024xf32>
    %5 = vector.broadcast %4 : vector<1x1024xf32> to vector<8x1024xf32>
    %6 = arith.addf %3, %5 : vector<8x1024xf32>
    %cst_5 = arith.constant 0.000000e+00 : f32
    %7 = vector.broadcast %cst_5 : f32 to vector<8x1024xf32>
    %8 = arith.maximumf %6, %7 : vector<8x1024xf32>
    %9 = arith.truncf %8 : vector<8x1024xf32> to vector<8x1024xbf16>
    %c0_6 = arith.constant 0 : index
    %c0_7 = arith.constant 0 : index
    %10 = vector.load %arg4[%c0_6, %c0_7] : memref<1024x512xbf16, #tpu.memory_space<vmem>>, vector<1024x512xbf16>
    %cst_8 = arith.constant dense<0.000000e+00> : vector<8x512xf32>
    %11 = tpu.matmul %9, %10, %cst_8 {dimension_numbers = #tpu.dot_dimension_numbers<[1], [0], [0], [1], [0, 0, 1, 1], [], []>} : vector<8x1024xbf16>, vector<1024x512xbf16>, vector<8x512xf32> -> vector<8x512xf32>
    %c0_9 = arith.constant 0 : index
    %c0_10 = arith.constant 0 : index
    %12 = vector.load %arg5[%c0_9, %c0_10] : memref<1x512xf32, #tpu.memory_space<vmem>>, vector<1x512xf32>
    %13 = vector.broadcast %12 : vector<1x512xf32> to vector<8x512xf32>
    %14 = arith.addf %11, %13 : vector<8x512xf32>
    %cst_11 = arith.constant 0.000000e+00 : f32
    %15 = vector.broadcast %cst_11 : f32 to vector<8x512xf32>
    %16 = arith.maximumf %14, %15 : vector<8x512xf32>
    %17 = arith.truncf %16 : vector<8x512xf32> to vector<8x512xbf16>
    %c0_12 = arith.constant 0 : index
    %c0_13 = arith.constant 0 : index
    %18 = vector.load %arg6[%c0_12, %c0_13] : memref<512x256xbf16, #tpu.memory_space<vmem>>, vector<512x256xbf16>
    %cst_14 = arith.constant dense<0.000000e+00> : vector<8x256xf32>
    %19 = tpu.matmul %17, %18, %cst_14 {dimension_numbers = #tpu.dot_dimension_numbers<[1], [0], [0], [1], [0, 0, 1, 1], [], []>} : vector<8x512xbf16>, vector<512x256xbf16>, vector<8x256xf32> -> vector<8x256xf32>
    %c0_15 = arith.constant 0 : index
    %c0_16 = arith.constant 0 : index
    %20 = vector.load %arg7[%c0_15, %c0_16] : memref<1x256xf32, #tpu.memory_space<vmem>>, vector<1x256xf32>
    %21 = vector.broadcast %20 : vector<1x256xf32> to vector<8x256xf32>
    %22 = arith.addf %19, %21 : vector<8x256xf32>
    %cst_17 = arith.constant 0.000000e+00 : f32
    %23 = vector.broadcast %cst_17 : f32 to vector<8x256xf32>
    %24 = arith.maximumf %22, %23 : vector<8x256xf32>
    %25 = arith.truncf %24 : vector<8x256xf32> to vector<8x256xbf16>
    %c0_18 = arith.constant 0 : index
    %c0_19 = arith.constant 0 : index
    %26 = vector.load %arg8[%c0_18, %c0_19] : memref<256x128xbf16, #tpu.memory_space<vmem>>, vector<256x128xbf16>
    %cst_20 = arith.constant dense<0.000000e+00> : vector<8x128xf32>
    %27 = tpu.matmul %25, %26, %cst_20 {dimension_numbers = #tpu.dot_dimension_numbers<[1], [0], [0], [1], [0, 0, 1, 1], [], []>} : vector<8x256xbf16>, vector<256x128xbf16>, vector<8x128xf32> -> vector<8x128xf32>
    %c0_21 = arith.constant 0 : index
    %c0_22 = arith.constant 0 : index
    %28 = vector.load %arg9[%c0_21, %c0_22] : memref<1x128xf32, #tpu.memory_space<vmem>>, vector<1x128xf32>
    %29 = vector.broadcast %28 : vector<1x128xf32> to vector<8x128xf32>
    %30 = arith.addf %27, %29 : vector<8x128xf32>
    %cst_23 = arith.constant 0.000000e+00 : f32
    %31 = vector.broadcast %cst_23 : f32 to vector<8x128xf32>
    %32 = arith.maximumf %30, %31 : vector<8x128xf32>
    %33 = arith.truncf %32 : vector<8x128xf32> to vector<8x128xbf16>
    %c0_24 = arith.constant 0 : index
    %c0_25 = arith.constant 0 : index
    %34 = vector.load %arg10[%c0_24, %c0_25] : memref<128x128xbf16, #tpu.memory_space<vmem>>, vector<128x128xbf16>
    %cst_26 = arith.constant dense<0.000000e+00> : vector<8x128xf32>
    %35 = tpu.matmul %33, %34, %cst_26 {dimension_numbers = #tpu.dot_dimension_numbers<[1], [0], [0], [1], [0, 0, 1, 1], [], []>} : vector<8x128xbf16>, vector<128x128xbf16>, vector<8x128xf32> -> vector<8x128xf32>
    %c0_27 = arith.constant 0 : index
    %c0_28 = arith.constant 0 : index
    %36 = vector.load %arg11[%c0_27, %c0_28] : memref<1x128xf32, #tpu.memory_space<vmem>>, vector<1x128xf32>
    %37 = vector.broadcast %36 : vector<1x128xf32> to vector<8x128xf32>
    %38 = arith.addf %35, %37 : vector<8x128xf32>
    %c0_29 = arith.constant 0 : index
    %c0_30 = arith.constant 0 : index
    %39 = vector.load %arg12[%c0_29, %c0_30] : memref<8x128xf32, #tpu.memory_space<vmem>>, vector<8x128xf32>
    tpu.vector_store %arg12[%c0_29, %c0_30], %38 {strides = array<i32>} : memref<8x128xf32, #tpu.memory_space<vmem>>, vector<8x128xf32>,
    return
  }
  func.func @transform_0(%arg0: i32) -> (i32, i32) {
    %c0_i32 = arith.constant 0 : i32
    %c0_i32_0 = arith.constant 0 : i32
    return %arg0, %c0_i32 : i32, i32
  }
  func.func @transform_1(%arg0: i32) -> (i32, i32) {
    %c0_i32 = arith.constant 0 : i32
    %c0_i32_0 = arith.constant 0 : i32
    %c0_i32_1 = arith.constant 0 : i32
    return %c0_i32, %c0_i32_0 : i32, i32
  }
  func.func @transform_2(%arg0: i32) -> (i32, i32) {
    %c0_i32 = arith.constant 0 : i32
    %c0_i32_0 = arith.constant 0 : i32
    %c0_i32_1 = arith.constant 0 : i32
    return %c0_i32, %c0_i32_0 : i32, i32
  }
  func.func @transform_3(%arg0: i32) -> (i32, i32) {
    %c0_i32 = arith.constant 0 : i32
    %c0_i32_0 = arith.constant 0 : i32
    %c0_i32_1 = arith.constant 0 : i32
    return %c0_i32, %c0_i32_0 : i32, i32
  }
  func.func @transform_4(%arg0: i32) -> (i32, i32) {
    %c0_i32 = arith.constant 0 : i32
    %c0_i32_0 = arith.constant 0 : i32
    %c0_i32_1 = arith.constant 0 : i32
    return %c0_i32, %c0_i32_0 : i32, i32
  }
  func.func @transform_5(%arg0: i32) -> (i32, i32) {
    %c0_i32 = arith.constant 0 : i32
    %c0_i32_0 = arith.constant 0 : i32
    %c0_i32_1 = arith.constant 0 : i32
    return %c0_i32, %c0_i32_0 : i32, i32
  }
  func.func @transform_6(%arg0: i32) -> (i32, i32) {
    %c0_i32 = arith.constant 0 : i32
    %c0_i32_0 = arith.constant 0 : i32
    %c0_i32_1 = arith.constant 0 : i32
    return %c0_i32, %c0_i32_0 : i32, i32
  }
  func.func @transform_7(%arg0: i32) -> (i32, i32) {
    %c0_i32 = arith.constant 0 : i32
    %c0_i32_0 = arith.constant 0 : i32
    %c0_i32_1 = arith.constant 0 : i32
    return %c0_i32, %c0_i32_0 : i32, i32
  }
  func.func @transform_8(%arg0: i32) -> (i32, i32) {
    %c0_i32 = arith.constant 0 : i32
    %c0_i32_0 = arith.constant 0 : i32
    %c0_i32_1 = arith.constant 0 : i32
    return %c0_i32, %c0_i32_0 : i32, i32
  }
  func.func @transform_9(%arg0: i32) -> (i32, i32) {
    %c0_i32 = arith.constant 0 : i32
    %c0_i32_0 = arith.constant 0 : i32
    %c0_i32_1 = arith.constant 0 : i32
    return %c0_i32, %c0_i32_0 : i32, i32
  }
  func.func @transform_10(%arg0: i32) -> (i32, i32) {
    %c0_i32 = arith.constant 0 : i32
    %c0_i32_0 = arith.constant 0 : i32
    %c0_i32_1 = arith.constant 0 : i32
    return %c0_i32, %c0_i32_0 : i32, i32
  }
  func.func @transform_11(%arg0: i32) -> (i32, i32) {
    %c0_i32 = arith.constant 0 : i32
    %c0_i32_0 = arith.constant 0 : i32
    return %arg0, %c0_i32 : i32, i32
  }
}

</mosaic_0001>

<llo_original>
// kernel: tpu_custom_call.1
$region0: #{tpu_custom_call.1}
  #allocation0 [shape = 'u32[]', space=smem, size = 0x4, offset = 0x4, fixed_abs, tag = 'smem constant byte address 0x4 - core index']
  #allocation1 [shape = 'u32[72,128]{1,0:T(1,128)}', space=vmem, size = 0x9000, scoped, tag = 'internal scratch']
  %s0 = inlined_call_operand.vmem [shape: f32[16,8], index: 0, kind: input, shape index: {}]
  %s1 = inlined_call_operand.hbm [shape: bf16[8,1024], index: 1, kind: input, shape index: {}]
  %s2 = inlined_call_operand.vmem [shape: f32[1,1024], index: 2, kind: input, shape index: {}]
  %s3 = inlined_call_operand.hbm [shape: bf16[1024,512], index: 3, kind: input, shape index: {}]
  %s4 = inlined_call_operand.vmem [shape: f32[1,512], index: 4, kind: input, shape index: {}]
  %s5 = inlined_call_operand.hbm [shape: bf16[512,256], index: 5, kind: input, shape index: {}]
  %s6 = inlined_call_operand.vmem [shape: f32[1,256], index: 6, kind: input, shape index: {}]
  %s7 = inlined_call_operand.hbm [shape: bf16[256,128], index: 7, kind: input, shape index: {}]
  %s8 = inlined_call_operand.vmem [shape: f32[1,128], index: 8, kind: input, shape index: {}]
  %s9 = inlined_call_operand.hbm [shape: bf16[128,128], index: 9, kind: input, shape index: {}]
  %s10 = inlined_call_operand.vmem [shape: f32[1,128], index: 10, kind: input, shape index: {}]
  %s11 = inlined_call_operand.hbm [shape: f32[16,128], index: 11, kind: output, shape index: {}]
  %s12 = sld [smem:[#allocation0]]
  $region97: #{tpu_custom_call.1} parent=0
    _
  %s14 = ssub.s32 1, %s12
  %s15 = scalar_select 0, %s14, %s12
  $region1: #{tpu_custom_call.1} parent=0
    #allocation2 [shape = 'u8[16384]{0}', space=vmem, size = 0x4000, scoped, tag = 'input window, operand 1, single buffered']
    #allocation3 [shape = 's32[2]{0}', space=sflag, size = 0x8, scoped, tag = 'scoped memory for tpu_custom_call.1']
    #allocation4 [shape = 's32[2]{0}', space=sflag, size = 0x8, scoped, tag = 'scoped memory for tpu_custom_call.1']
    #allocation5 [shape = 'u8[1048576]{0}', space=vmem, size = 0x100000, scoped, tag = 'input window, operand 3, single buffered']
    #allocation6 [shape = 's32[1]{0}', space=sflag, size = 0x4, scoped, tag = 'scoped memory for tpu_custom_call.1']
    #allocation7 [shape = 'u8[262144]{0}', space=vmem, size = 0x40000, scoped, tag = 'input window, operand 5, single buffered']
    #allocation8 [shape = 'u8[65536]{0}', space=vmem, size = 0x10000, scoped, tag = 'input window, operand 7, single buffered']
    #allocation9 [shape = 's32[1]{0}', space=sflag, size = 0x4, scoped, tag = 'scoped memory for tpu_custom_call.1']
    #allocation10 [shape = 'u8[32768]{0}', space=vmem, size = 0x8000, scoped, tag = 'input window, operand 9, single buffered']
    #allocation11 [shape = 'u8[8192]{0}', space=vmem, size = 0x2000, scoped, tag = 'output window, operand 0']
    %16 = vsyncpa [#allocation3], 0
    %17 = vsyncpa [#allocation6], 0
    %18 = vsyncpa [#allocation9], 0
    %19 = vsyncpa [#allocation4], 0
    %s20 = scalar_lea.sflag [#allocation4], 1
    %21 = vsyncpa %s20, 0
    loop: start=0, step=1, limit=4
    $region2: #{tpu_custom_call.1} parent=1 // loop_pre_header
      _
    $region3: #{tpu_custom_call.1} parent=1 // loop_header
      %s23 = sphi 0, %s27
      %p24 = scmp.ge.s32.totalorder %s23, 4
      %s33 = sphi 0, %s35
      %s36 = sphi 0, %s33
      %s37 = sphi 0, %s36
      %s53 = sphi 0, %s37
      %s57 = sphi 0, %s57
      %s59 = sphi 0, %s57
      %s60 = sphi 0, %s59
      %s74 = sphi 0, %s60
      %s78 = sphi 0, %s78
      %s80 = sphi 0, %s78
      %s81 = sphi 0, %s80
      %s95 = sphi 0, %s81
      %s99 = sphi 0, %s99
      %s101 = sphi 0, %s99
      %s102 = sphi 0, %s101
      %s116 = sphi 0, %s102
      %s120 = sphi 0, %s120
      %s122 = sphi 0, %s120
      %s123 = sphi 0, %s122
      %s137 = sphi 0, %s123
      %s141 = sphi 0, %s141
      %s143 = sphi 0, %s141
      %s144 = sphi 0, %s143
      %s158 = sphi 0, %s144
      %s162 = sphi 0, %s162
      %s164 = sphi 0, %s162
      %s165 = sphi 0, %s164
      %s179 = sphi 0, %s165
      %s183 = sphi 0, %s183
      %s185 = sphi 0, %s183
      %s186 = sphi 0, %s185
      %s200 = sphi 0, %s186
      %s204 = sphi 0, %s204
      %s206 = sphi 0, %s204
      %s207 = sphi 0, %s206
      %s221 = sphi 0, %s207
      %s225 = sphi 0, %s225
      %s227 = sphi 0, %s225
      %s228 = sphi 0, %s227
      %s242 = sphi 0, %s228
      %s246 = sphi 0, %s246
      %s248 = sphi 0, %s246
      %s249 = sphi 0, %s248
      %s263 = sphi 0, %s249
      %s269 = sphi 0, %s271
      %s272 = sphi 0, %s269
      %s273 = sphi 0, %s272
      %s289 = sphi 0, %s273
    $region4: #{tpu_custom_call.1} parent=1 // loop_header_branch
      %26 = sbr.rel (%p24) target = $region8
    $region5: #{tpu_custom_call.1} parent=1 // loop_body
      %s28 = ssub.s32 %s23, 1
      %s29 = ssub.s32 %s23, 2
      %s30 = sadd.s32 %s23, 1
      %s31 = ssub.s32 %s23, %s30
      %p32 = scmp.eq.s32.totalorder %s31, 0
      %s34 = sadd.s32 %s33, 1
      %s35 = scalar_select %p32, %s33, %s34
      %p38 = pneg %p32
      %p39 = scmp.eq.s32.totalorder %s23, 1
      %p40 = por %p38, %p39
      %p41 = scmp.ne.s32.totalorder %s33, %s36
      %p42 = scmp.eq.s32.totalorder %s23, 0
      %p43 = por %p41, %p42
      %p44 = scmp.ne.s32.totalorder %s33, %s36
      %p45 = scmp.eq.s32.totalorder %s28, 1
      %p46 = por %p44, %p45
      %p47 = scmp.ne.s32.totalorder %s36, %s37
      %p48 = scmp.eq.s32.totalorder %s28, 0
      %p49 = por %p47, %p48
      %p50 = scmp.ne.s32.totalorder %s36, %s37
      %p51 = scmp.eq.s32.totalorder %s29, 1
      %p52 = por %p50, %p51
      %p54 = scmp.ne.s32.totalorder %s37, %s53
      %p55 = scmp.eq.s32.totalorder %s29, 0
      %p56 = por %p54, %p55
      %s58 = sadd.s32 %s57, 1
      %p61 = scmp.eq.s32.totalorder %s23, 1
      %p62 = scmp.ne.s32.totalorder %s57, %s59
      %p63 = scmp.eq.s32.totalorder %s23, 0
      %p64 = por %p62, %p63
      %p65 = scmp.ne.s32.totalorder %s57, %s59
      %p66 = scmp.eq.s32.totalorder %s28, 1
      %p67 = por %p65, %p66
      %p68 = scmp.ne.s32.totalorder %s59, %s60
      %p69 = scmp.eq.s32.totalorder %s28, 0
      %p70 = por %p68, %p69
      %p71 = scmp.ne.s32.totalorder %s59, %s60
      %p72 = scmp.eq.s32.totalorder %s29, 1
      %p73 = por %p71, %p72
      %p75 = scmp.ne.s32.totalorder %s60, %s74
      %p76 = scmp.eq.s32.totalorder %s29, 0
      %p77 = por %p75, %p76
      %s79 = sadd.s32 %s78, 1
      %p82 = scmp.eq.s32.totalorder %s23, 1
      %p83 = scmp.ne.s32.totalorder %s78, %s80
      %p84 = scmp.eq.s32.totalorder %s23, 0
      %p85 = por %p83, %p84
      %p86 = scmp.ne.s32.totalorder %s78, %s80
      %p87 = scmp.eq.s32.totalorder %s28, 1
      %p88 = por %p86, %p87
      %p89 = scmp.ne.s32.totalorder %s80, %s81
      %p90 = scmp.eq.s32.totalorder %s28, 0
      %p91 = por %p89, %p90
      %p92 = scmp.ne.s32.totalorder %s80, %s81
      %p93 = scmp.eq.s32.totalorder %s29, 1
      %p94 = por %p92, %p93
      %p96 = scmp.ne.s32.totalorder %s81, %s95
      %p97 = scmp.eq.s32.totalorder %s29, 0
      %p98 = por %p96, %p97
      %s100 = sadd.s32 %s99, 1
      %p103 = scmp.eq.s32.totalorder %s23, 1
      %p104 = scmp.ne.s32.totalorder %s99, %s101
      %p105 = scmp.eq.s32.totalorder %s23, 0
      %p106 = por %p104, %p105
      %p107 = scmp.ne.s32.totalorder %s99, %s101
      %p108 = scmp.eq.s32.totalorder %s28, 1
      %p109 = por %p107, %p108
      %p110 = scmp.ne.s32.totalorder %s101, %s102
      %p111 = scmp.eq.s32.totalorder %s28, 0
      %p112 = por %p110, %p111
      %p113 = scmp.ne.s32.totalorder %s101, %s102
      %p114 = scmp.eq.s32.totalorder %s29, 1
      %p115 = por %p113, %p114
      %p117 = scmp.ne.s32.totalorder %s102, %s116
      %p118 = scmp.eq.s32.totalorder %s29, 0
      %p119 = por %p117, %p118
      %s121 = sadd.s32 %s120, 1
      %p124 = scmp.eq.s32.totalorder %s23, 1
      %p125 = scmp.ne.s32.totalorder %s120, %s122
      %p126 = scmp.eq.s32.totalorder %s23, 0
      %p127 = por %p125, %p126
      %p128 = scmp.ne.s32.totalorder %s120, %s122
      %p129 = scmp.eq.s32.totalorder %s28, 1
      %p130 = por %p128, %p129
      %p131 = scmp.ne.s32.totalorder %s122, %s123
      %p132 = scmp.eq.s32.totalorder %s28, 0
      %p133 = por %p131, %p132
      %p134 = scmp.ne.s32.totalorder %s122, %s123
      %p135 = scmp.eq.s32.totalorder %s29, 1
      %p136 = por %p134, %p135
      %p138 = scmp.ne.s32.totalorder %s123, %s137
      %p139 = scmp.eq.s32.totalorder %s29, 0
      %p140 = por %p138, %p139
      %s142 = sadd.s32 %s141, 1
      %p145 = scmp.eq.s32.totalorder %s23, 1
      %p146 = scmp.ne.s32.totalorder %s141, %s143
      %p147 = scmp.eq.s32.totalorder %s23, 0
      %p148 = por %p146, %p147
      %p149 = scmp.ne.s32.totalorder %s141, %s143
      %p150 = scmp.eq.s32.totalorder %s28, 1
      %p151 = por %p149, %p150
      %p152 = scmp.ne.s32.totalorder %s143, %s144
      %p153 = scmp.eq.s32.totalorder %s28, 0
      %p154 = por %p152, %p153
      %p155 = scmp.ne.s32.totalorder %s143, %s144
      %p156 = scmp.eq.s32.totalorder %s29, 1
      %p157 = por %p155, %p156
      %p159 = scmp.ne.s32.totalorder %s144, %s158
      %p160 = scmp.eq.s32.totalorder %s29, 0
      %p161 = por %p159, %p160
      %s163 = sadd.s32 %s162, 1
      %p166 = scmp.eq.s32.totalorder %s23, 1
      %p167 = scmp.ne.s32.totalorder %s162, %s164
      %p168 = scmp.eq.s32.totalorder %s23, 0
      %p169 = por %p167, %p168
      %p170 = scmp.ne.s32.totalorder %s162, %s164
      %p171 = scmp.eq.s32.totalorder %s28, 1
      %p172 = por %p170, %p171
      %p173 = scmp.ne.s32.totalorder %s164, %s165
      %p174 = scmp.eq.s32.totalorder %s28, 0
      %p175 = por %p173, %p174
      %p176 = scmp.ne.s32.totalorder %s164, %s165
      %p177 = scmp.eq.s32.totalorder %s29, 1
      %p178 = por %p176, %p177
      %p180 = scmp.ne.s32.totalorder %s165, %s179
      %p181 = scmp.eq.s32.totalorder %s29, 0
      %p182 = por %p180, %p181
      %s184 = sadd.s32 %s183, 1
      %p187 = scmp.eq.s32.totalorder %s23, 1
      %p188 = scmp.ne.s32.totalorder %s183, %s185
      %p189 = scmp.eq.s32.totalorder %s23, 0
      %p190 = por %p188, %p189
      %p191 = scmp.ne.s32.totalorder %s183, %s185
      %p192 = scmp.eq.s32.totalorder %s28, 1
      %p193 = por %p191, %p192
      %p194 = scmp.ne.s32.totalorder %s185, %s186
      %p195 = scmp.eq.s32.totalorder %s28, 0
      %p196 = por %p194, %p195
      %p197 = scmp.ne.s32.totalorder %s185, %s186
      %p198 = scmp.eq.s32.totalorder %s29, 1
      %p199 = por %p197, %p198
      %p201 = scmp.ne.s32.totalorder %s186, %s200
      %p202 = scmp.eq.s32.totalorder %s29, 0
      %p203 = por %p201, %p202
      %s205 = sadd.s32 %s204, 1
      %p208 = scmp.eq.s32.totalorder %s23, 1
      %p209 = scmp.ne.s32.totalorder %s204, %s206
      %p210 = scmp.eq.s32.totalorder %s23, 0
      %p211 = por %p209, %p210
      %p212 = scmp.ne.s32.totalorder %s204, %s206
      %p213 = scmp.eq.s32.totalorder %s28, 1
      %p214 = por %p212, %p213
      %p215 = scmp.ne.s32.totalorder %s206, %s207
      %p216 = scmp.eq.s32.totalorder %s28, 0
      %p217 = por %p215, %p216
      %p218 = scmp.ne.s32.totalorder %s206, %s207
      %p219 = scmp.eq.s32.totalorder %s29, 1
      %p220 = por %p218, %p219
      %p222 = scmp.ne.s32.totalorder %s207, %s221
      %p223 = scmp.eq.s32.totalorder %s29, 0
      %p224 = por %p222, %p223
      %s226 = sadd.s32 %s225, 1
      %p229 = scmp.eq.s32.totalorder %s23, 1
      %p230 = scmp.ne.s32.totalorder %s225, %s227
      %p231 = scmp.eq.s32.totalorder %s23, 0
      %p232 = por %p230, %p231
      %p233 = scmp.ne.s32.totalorder %s225, %s227
      %p234 = scmp.eq.s32.totalorder %s28, 1
      %p235 = por %p233, %p234
      %p236 = scmp.ne.s32.totalorder %s227, %s228
      %p237 = scmp.eq.s32.totalorder %s28, 0
      %p238 = por %p236, %p237
      %p239 = scmp.ne.s32.totalorder %s227, %s228
      %p240 = scmp.eq.s32.totalorder %s29, 1
      %p241 = por %p239, %p240
      %p243 = scmp.ne.s32.totalorder %s228, %s242
      %p244 = scmp.eq.s32.totalorder %s29, 0
      %p245 = por %p243, %p244
      %s247 = sadd.s32 %s246, 1
      %p250 = scmp.eq.s32.totalorder %s23, 1
      %p251 = scmp.ne.s32.totalorder %s246, %s248
      %p252 = scmp.eq.s32.totalorder %s23, 0
      %p253 = por %p251, %p252
      %p254 = scmp.ne.s32.totalorder %s246, %s248
      %p255 = scmp.eq.s32.totalorder %s28, 1
      %p256 = por %p254, %p255
      %p257 = scmp.ne.s32.totalorder %s248, %s249
      %p258 = scmp.eq.s32.totalorder %s28, 0
      %p259 = por %p257, %p258
      %p260 = scmp.ne.s32.totalorder %s248, %s249
      %p261 = scmp.eq.s32.totalorder %s29, 1
      %p262 = por %p260, %p261
      %p264 = scmp.ne.s32.totalorder %s249, %s263
      %p265 = scmp.eq.s32.totalorder %s29, 0
      %p266 = por %p264, %p265
      %s267 = ssub.s32 %s23, %s30
      %p268 = scmp.eq.s32.totalorder %s267, 0
      %s270 = sadd.s32 %s269, 1
      %s271 = scalar_select %p268, %s269, %s270
      %p274 = pneg %p268
      %p275 = scmp.eq.s32.totalorder %s23, 1
      %p276 = por %p274, %p275
      %p277 = scmp.ne.s32.totalorder %s269, %s272
      %p278 = scmp.eq.s32.totalorder %s23, 0
      %p279 = por %p277, %p278
      %p280 = scmp.ne.s32.totalorder %s269, %s272
      %p281 = scmp.eq.s32.totalorder %s28, 1
      %p282 = por %p280, %p281
      %p283 = scmp.ne.s32.totalorder %s272, %s273
      %p284 = scmp.eq.s32.totalorder %s28, 0
      %p285 = por %p283, %p284
      %p286 = scmp.ne.s32.totalorder %s272, %s273
      %p287 = scmp.eq.s32.totalorder %s29, 1
      %p288 = por %p286, %p287
      %p290 = scmp.ne.s32.totalorder %s273, %s289
      %p291 = scmp.eq.s32.totalorder %s29, 0
      %p292 = por %p290, %p291
      %p293 = scmp.le.s32.totalorder 1, %s23
      %p294 = scmp.lt.s32.totalorder %s23, 3
      %p295 = pnand %p293, %p294
      %p296 = pneg %p295
      // Predicated region
      $region9: #{tpu_custom_call.1} parent=5 // pred_check
        _
      $region10: #{tpu_custom_call.1} parent=5 // pred_check_branch
        %298 = sbr.rel (%p295) target = $region12
      $region11: #{tpu_custom_call.1} parent=5 // pred_region
        %s299 = ssub.s32 %s23, 1
        // Predicated region
        $region13: #{tpu_custom_call.1} parent=11 // pred_check
          %p300 = pneg %p70
        $region14: #{tpu_custom_call.1} parent=11 // pred_check_branch
          %302 = sbr.rel (%p300) target = $region16
        $region15: #{tpu_custom_call.1} parent=11 // pred_region
          %304 = vsyncadd [#allocation3], 0
          %s306 = sshll.u32 %s1, 4
          %s307 = int_to_ptr.hbm [resolvable:$true] %s306
          %s308 = sshll.u32 [#allocation2], 4
          %s309 = int_to_ptr.vmem [resolvable:$true] %s308
          %311 = dma.hbm_to_vmem [thread:$0]  %s307, 512, %s309, [#allocation3]
        $region16: #{tpu_custom_call.1} parent=11 // pred_fallthru
          _
        // Predicated region
        $region17: #{tpu_custom_call.1} parent=11 // pred_check
          %p312 = pneg %p91
        $region18: #{tpu_custom_call.1} parent=11 // pred_check_branch
          %314 = sbr.rel (%p312) target = $region20
        $region19: #{tpu_custom_call.1} parent=11 // pred_region
          _
        $region20: #{tpu_custom_call.1} parent=11 // pred_fallthru
          _
        // Predicated region
        $region21: #{tpu_custom_call.1} parent=11 // pred_check
          %p315 = pneg %p112
        $region22: #{tpu_custom_call.1} parent=11 // pred_check_branch
          %317 = sbr.rel (%p315) target = $region24
        $region23: #{tpu_custom_call.1} parent=11 // pred_region
          %319 = vsyncadd [#allocation6], 0
          %s320 = sshll.u32 %s3, 4
          %s321 = int_to_ptr.hbm [resolvable:$true] %s320
          %s322 = sshll.u32 [#allocation5], 4
          %s323 = int_to_ptr.vmem [resolvable:$true] %s322
          %328 = dma.hbm_to_vmem [thread:$0]  %s321, 32768, %s323, [#allocation6], 256, 256, 16
        $region24: #{tpu_custom_call.1} parent=11 // pred_fallthru
          _
        // Predicated region
        $region25: #{tpu_custom_call.1} parent=11 // pred_check
          %p329 = pneg %p133
        $region26: #{tpu_custom_call.1} parent=11 // pred_check_branch
          %331 = sbr.rel (%p329) target = $region28
        $region27: #{tpu_custom_call.1} parent=11 // pred_region
          _
        $region28: #{tpu_custom_call.1} parent=11 // pred_fallthru
          _
        // Predicated region
        $region29: #{tpu_custom_call.1} parent=11 // pred_check
          %p332 = pneg %p154
        $region30: #{tpu_custom_call.1} parent=11 // pred_check_branch
          %334 = sbr.rel (%p332) target = $region32
        $region31: #{tpu_custom_call.1} parent=11 // pred_region
          %336 = vsyncadd [#allocation6], 0
          %s337 = sshll.u32 %s5, 4
          %s338 = int_to_ptr.hbm [resolvable:$true] %s337
          %s339 = sshll.u32 [#allocation7], 4
          %s340 = int_to_ptr.vmem [resolvable:$true] %s339
          %345 = dma.hbm_to_vmem [thread:$0]  %s338, 8192, %s340, [#allocation6], 128, 128, 8
        $region32: #{tpu_custom_call.1} parent=11 // pred_fallthru
          _
        // Predicated region
        $region33: #{tpu_custom_call.1} parent=11 // pred_check
          %p346 = pneg %p175
        $region34: #{tpu_custom_call.1} parent=11 // pred_check_branch
          %348 = sbr.rel (%p346) target = $region36
        $region35: #{tpu_custom_call.1} parent=11 // pred_region
          _
        $region36: #{tpu_custom_call.1} parent=11 // pred_fallthru
          _
        // Predicated region
        $region37: #{tpu_custom_call.1} parent=11 // pred_check
          %p349 = pneg %p196
        $region38: #{tpu_custom_call.1} parent=11 // pred_check_branch
          %351 = sbr.rel (%p349) target = $region40
        $region39: #{tpu_custom_call.1} parent=11 // pred_region
          %353 = vsyncadd [#allocation9], 0
          %s354 = sshll.u32 %s7, 4
          %s355 = int_to_ptr.hbm [resolvable:$true] %s354
          %s356 = sshll.u32 [#allocation8], 4
          %s357 = int_to_ptr.vmem [resolvable:$true] %s356
          %362 = dma.hbm_to_vmem [thread:$0]  %s355, 2048, %s357, [#allocation9], 64, 64, 4
        $region40: #{tpu_custom_call.1} parent=11 // pred_fallthru
          _
        // Predicated region
        $region41: #{tpu_custom_call.1} parent=11 // pred_check
          %p363 = pneg %p217
        $region42: #{tpu_custom_call.1} parent=11 // pred_check_branch
          %365 = sbr.rel (%p363) target = $region44
        $region43: #{tpu_custom_call.1} parent=11 // pred_region
          _
        $region44: #{tpu_custom_call.1} parent=11 // pred_fallthru
          _
        // Predicated region
        $region45: #{tpu_custom_call.1} parent=11 // pred_check
          %p366 = pneg %p238
        $region46: #{tpu_custom_call.1} parent=11 // pred_check_branch
          %368 = sbr.rel (%p366) target = $region48
        $region47: #{tpu_custom_call.1} parent=11 // pred_region
          %370 = vsyncadd [#allocation9], 0
          %s371 = sshll.u32 %s9, 4
          %s372 = int_to_ptr.hbm [resolvable:$true] %s371
          %s373 = sshll.u32 [#allocation10], 4
          %s374 = int_to_ptr.vmem [resolvable:$true] %s373
          %379 = dma.hbm_to_vmem [thread:$0]  %s372, 1024, %s374, [#allocation9], 64, 64, 4
        $region48: #{tpu_custom_call.1} parent=11 // pred_fallthru
          _
        // Predicated region
        $region49: #{tpu_custom_call.1} parent=11 // pred_check
          %p380 = pneg %p259
        $region50: #{tpu_custom_call.1} parent=11 // pred_check_branch
          %382 = sbr.rel (%p380) target = $region52
        $region51: #{tpu_custom_call.1} parent=11 // pred_region
          _
        $region52: #{tpu_custom_call.1} parent=11 // pred_fallthru
          _
      $region12: #{tpu_custom_call.1} parent=5 // pred_fallthru
        _
      %p383 = scmp.lt.s32.totalorder %s23, 2
      // Predicated region
      $region53: #{tpu_custom_call.1} parent=5 // pred_check
        %p384 = pneg %p383
      $region54: #{tpu_custom_call.1} parent=5 // pred_check_branch
        %386 = sbr.rel (%p384) target = $region56
      $region55: #{tpu_custom_call.1} parent=5 // pred_region
        // Predicated region
        $region57: #{tpu_custom_call.1} parent=55 // pred_check
          %p387 = pneg %p43
        $region58: #{tpu_custom_call.1} parent=55 // pred_check_branch
          %389 = sbr.rel (%p387) target = $region60
        $region59: #{tpu_custom_call.1} parent=55 // pred_region
          %p390 = scmp.lt.s32.totalorder %s23, 1
          %s391 = scalar_select %p390, %s23, 1
          %s392 = smul.addr %s391, 8
          %s393 = scalar_lea.vmem %s0, %s392
        $region60: #{tpu_custom_call.1} parent=55 // pred_fallthru
          _
      $region56: #{tpu_custom_call.1} parent=5 // pred_fallthru
        _
      %p394 = scmp.le.s32.totalorder 1, %s23
      %p395 = scmp.lt.s32.totalorder %s23, 3
      %p396 = pnand %p394, %p395
      %p397 = pneg %p396
      // Predicated region
      $region61: #{tpu_custom_call.1} parent=5 // pred_check
        _
      $region62: #{tpu_custom_call.1} parent=5 // pred_check_branch
        %399 = sbr.rel (%p396) target = $region64
      $region63: #{tpu_custom_call.1} parent=5 // pred_region
        %s400 = ssub.s32 %s23, 1
        // Predicated region
        $region65: #{tpu_custom_call.1} parent=63 // pred_check
          %p401 = pneg %p70
        $region66: #{tpu_custom_call.1} parent=63 // pred_check_branch
          %403 = sbr.rel (%p401) target = $region68
        $region67: #{tpu_custom_call.1} parent=63 // pred_region
          %405 = dma.done [#allocation3], 512
        $region68: #{tpu_custom_call.1} parent=63 // pred_fallthru
          _
        // Predicated region
        $region69: #{tpu_custom_call.1} parent=63 // pred_check
          %p406 = pneg %p112
        $region70: #{tpu_custom_call.1} parent=63 // pred_check_branch
          %408 = sbr.rel (%p406) target = $region72
        $region71: #{tpu_custom_call.1} parent=63 // pred_region
          %410 = dma.done [#allocation6], 32768
        $region72: #{tpu_custom_call.1} parent=63 // pred_fallthru
          _
        // Predicated region
        $region73: #{tpu_custom_call.1} parent=63 // pred_check
          %p411 = pneg %p154
        $region74: #{tpu_custom_call.1} parent=63 // pred_check_branch
          %413 = sbr.rel (%p411) target = $region76
        $region75: #{tpu_custom_call.1} parent=63 // pred_region
          %415 = dma.done [#allocation6], 8192
        $region76: #{tpu_custom_call.1} parent=63 // pred_fallthru
          _
        // Predicated region
        $region77: #{tpu_custom_call.1} parent=63 // pred_check
          %p416 = pneg %p196
        $region78: #{tpu_custom_call.1} parent=63 // pred_check_branch
          %418 = sbr.rel (%p416) target = $region80
        $region79: #{tpu_custom_call.1} parent=63 // pred_region
          %420 = dma.done [#allocation9], 2048
        $region80: #{tpu_custom_call.1} parent=63 // pred_fallthru
          _
        // Predicated region
        $region81: #{tpu_custom_call.1} parent=63 // pred_check
          %p421 = pneg %p238
        $region82: #{tpu_custom_call.1} parent=63 // pred_check_branch
          %423 = sbr.rel (%p421) target = $region84
        $region83: #{tpu_custom_call.1} parent=63 // pred_region
          %425 = dma.done [#allocation9], 1024
        $region84: #{tpu_custom_call.1} parent=63 // pred_fallthru
          _
        %p426 = scmp.lt.s32.totalorder %s28, 1
        %s427 = scalar_select %p426, %s28, 1
        %s428 = smul.addr %s427, 8
        %s429 = scalar_lea.vmem %s0, %s428
        %p430 = pneg %p49
        %p431 = pneg %p46
        %p432 = pneg %p70
        %p433 = pneg %p67
        %p434 = pneg %p91
        %p435 = pneg %p88
        %p436 = pneg %p112
        %p437 = pneg %p109
        %p438 = pneg %p133
        %p439 = pneg %p130
        %p440 = pneg %p154
        %p441 = pneg %p151
        %p442 = pneg %p175
        %p443 = pneg %p172
        %p444 = pneg %p196
        %p445 = pneg %p193
        %p446 = pneg %p217
        %p447 = pneg %p214
        %p448 = pneg %p238
        %p449 = pneg %p235
        %p450 = pneg %p259
        %p451 = pneg %p256
        %p452 = pneg %p285
        %p453 = pneg %p282
        %s454 = sand.u32 %s272, 1
        %s455 = scalar_lea.sflag [#allocation4], %s454
        %s456 = sand.u32 %s272, 1
        %s457 = smul.addr %s456, 8
        %s458 = scalar_lea.vmem [#allocation11], %s457
        %p459 = scmp.lt.s32.totalorder %s28, 1
        %s460 = scalar_select %p459, %s28, 1
        %s461 = smul.addr %s460, 8
        %s462 = scalar_lea.vmem %s0, %s461
        %v464 = vld [vmem:[%s462] sm:$0xff]
        %v465 = vpack.c.bf16 %v464, %v464
        %v466 = vld [vmem:[#allocation2] sm:$0xff]
        %v467 = vld [vmem:[#allocation2 + $0x8] sm:$0xff]
        %v468 = vld [vmem:[#allocation2 + $0x10] sm:$0xff]
        %v469 = vld [vmem:[#allocation2 + $0x18] sm:$0xff]
        %v470 = vld [vmem:[%s2] sm:$0xff]
        %v472 = vperm.slane %v470, 0
        %v473 = vperm.slane %v470, 1
        %v474 = vperm.slane %v470, 2
        %v475 = vperm.slane %v470, 3
        %v476 = vperm.slane %v470, 4
        %v477 = vperm.slane %v470, 5
        %v478 = vperm.slane %v470, 6
        %v479 = vperm.slane %v470, 7
        %v492 = vunpack.c.l.b16 %v466
        %v493 = vunpack.c.h.b16 %v466
        %v494 = vunpack.c.l.b16 %v467
        %v495 = vunpack.c.h.b16 %v467
        %v496 = vunpack.c.l.b16 %v468
        %v497 = vunpack.c.h.b16 %v468
        %v498 = vunpack.c.l.b16 %v469
        %v499 = vunpack.c.h.b16 %v469
        %v500 = vpack.c.b16 %v492, %v492
        %v501 = vpack.c.b16 %v493, %v493
        %v502 = vpack.c.b16 %v494, %v494
        %v503 = vpack.c.b16 %v495, %v495
        %v504 = vpack.c.b16 %v496, %v496
        %v505 = vpack.c.b16 %v497, %v497
        %v506 = vpack.c.b16 %v498, %v498
        %v507 = vpack.c.b16 %v499, %v499
        %vm508 = vcmask 64512
        %v510 = vsel %vm508, %v465, 0
        %vm512 = vcmask 1043456
        %v514 = vsel %vm512, %v500, 0
        %v517 = vsel %vm512, %v501, 0
        %v520 = vsel %vm512, %v502, 0
        %v523 = vsel %vm512, %v503, 0
        %v526 = vsel %vm512, %v504, 0
        %v529 = vsel %vm512, %v505, 0
        %v532 = vsel %vm512, %v506, 0
        %v535 = vsel %vm512, %v507, 0
        %537 = vmatpush.bf16.msra.mxu0 0
        %538 = vmatpush.bf16.msra.mxu0 0
        %539 = vmatpush.bf16.msra.mxu0 0
        %540 = vmatpush.bf16.msra.mxu0 0
        %541 = vmatpush.bf16.msra.mxu0 0
        %542 = vmatpush.bf16.msra.mxu0 0
        %543 = vmatpush.bf16.msra.mxu0 0
        %544 = vmatpush.bf16.msra.mxu0 %v514
        %545 = vmatmul.bf16.gmra.mxu0 %v510
        %v546 = vpop.f32.mrf.mxu0
        %v547 = vadd.f32 %v472, %v546
        %v548 = vpop.f32.mrf.mxu0
        %549 = vdwg.mxu0
        %550 = vmatpush.bf16.msra.mxu0 0
        %551 = vmatpush.bf16.msra.mxu0 0
        %552 = vmatpush.bf16.msra.mxu0 0
        %553 = vmatpush.bf16.msra.mxu0 0
        %554 = vmatpush.bf16.msra.mxu0 0
        %555 = vmatpush.bf16.msra.mxu0 0
        %556 = vmatpush.bf16.msra.mxu0 0
        %557 = vmatpush.bf16.msra.mxu0 %v517
        %558 = vmatmul.bf16.gmra.mxu0 %v510
        %v559 = vpop.f32.mrf.mxu0
        %v560 = vadd.f32 %v473, %v559
        %v561 = vpop.f32.mrf.mxu0
        %562 = vdwg.mxu0
        %563 = vmatpush.bf16.msra.mxu0 0
        %564 = vmatpush.bf16.msra.mxu0 0
        %565 = vmatpush.bf16.msra.mxu0 0
        %566 = vmatpush.bf16.msra.mxu0 0
        %567 = vmatpush.bf16.msra.mxu0 0
        %568 = vmatpush.bf16.msra.mxu0 0
        %569 = vmatpush.bf16.msra.mxu0 0
        %570 = vmatpush.bf16.msra.mxu0 %v520
        %571 = vmatmul.bf16.gmra.mxu0 %v510
        %v572 = vpop.f32.mrf.mxu0
        %v573 = vadd.f32 %v474, %v572
        %v574 = vpop.f32.mrf.mxu0
        %575 = vdwg.mxu0
        %576 = vmatpush.bf16.msra.mxu0 0
        %577 = vmatpush.bf16.msra.mxu0 0
        %578 = vmatpush.bf16.msra.mxu0 0
        %579 = vmatpush.bf16.msra.mxu0 0
        %580 = vmatpush.bf16.msra.mxu0 0
        %581 = vmatpush.bf16.msra.mxu0 0
        %582 = vmatpush.bf16.msra.mxu0 0
        %583 = vmatpush.bf16.msra.mxu0 %v523
        %584 = vmatmul.bf16.gmra.mxu0 %v510
        %v585 = vpop.f32.mrf.mxu0
        %v586 = vadd.f32 %v475, %v585
        %v587 = vpop.f32.mrf.mxu0
        %588 = vdwg.mxu0
        %589 = vmatpush.bf16.msra.mxu0 0
        %590 = vmatpush.bf16.msra.mxu0 0
        %591 = vmatpush.bf16.msra.mxu0 0
        %592 = vmatpush.bf16.msra.mxu0 0
        %593 = vmatpush.bf16.msra.mxu0 0
        %594 = vmatpush.bf16.msra.mxu0 0
        %595 = vmatpush.bf16.msra.mxu0 0
        %596 = vmatpush.bf16.msra.mxu0 %v526
        %597 = vmatmul.bf16.gmra.mxu0 %v510
        %v598 = vpop.f32.mrf.mxu0
        %v599 = vadd.f32 %v476, %v598
        %v600 = vpop.f32.mrf.mxu0
        %601 = vdwg.mxu0
        %602 = vmatpush.bf16.msra.mxu0 0
        %603 = vmatpush.bf16.msra.mxu0 0
        %604 = vmatpush.bf16.msra.mxu0 0
        %605 = vmatpush.bf16.msra.mxu0 0
        %606 = vmatpush.bf16.msra.mxu0 0
        %607 = vmatpush.bf16.msra.mxu0 0
        %608 = vmatpush.bf16.msra.mxu0 0
        %609 = vmatpush.bf16.msra.mxu0 %v529
        %610 = vmatmul.bf16.gmra.mxu0 %v510
        %v611 = vpop.f32.mrf.mxu0
        %v612 = vadd.f32 %v477, %v611
        %v613 = vpop.f32.mrf.mxu0
        %614 = vdwg.mxu0
        %615 = vmatpush.bf16.msra.mxu0 0
        %616 = vmatpush.bf16.msra.mxu0 0
        %617 = vmatpush.bf16.msra.mxu0 0
        %618 = vmatpush.bf16.msra.mxu0 0
        %619 = vmatpush.bf16.msra.mxu0 0
        %620 = vmatpush.bf16.msra.mxu0 0
        %621 = vmatpush.bf16.msra.mxu0 0
        %622 = vmatpush.bf16.msra.mxu0 %v532
        %623 = vmatmul.bf16.gmra.mxu0 %v510
        %v624 = vpop.f32.mrf.mxu0
        %v625 = vadd.f32 %v478, %v624
        %v626 = vpop.f32.mrf.mxu0
        %627 = vdwg.mxu0
        %628 = vmatpush.bf16.msra.mxu0 0
        %629 = vmatpush.bf16.msra.mxu0 0
        %630 = vmatpush.bf16.msra.mxu0 0
        %631 = vmatpush.bf16.msra.mxu0 0
        %632 = vmatpush.bf16.msra.mxu0 0
        %633 = vmatpush.bf16.msra.mxu0 0
        %634 = vmatpush.bf16.msra.mxu0 0
        %635 = vmatpush.bf16.msra.mxu0 %v535
        %636 = vmatmul.bf16.gmra.mxu0 %v510
        %v637 = vpop.f32.mrf.mxu0
        %v638 = vadd.f32 %v479, %v637
        %v639 = vpop.f32.mrf.mxu0
        %640 = vdwg.mxu0
        %v641 = vmax.f32 %v547, 0.0
        %v642 = vmax.f32 %v560, 0.0
        %v643 = vmax.f32 %v573, 0.0
        %v644 = vmax.f32 %v586, 0.0
        %v645 = vmax.f32 %v599, 0.0
        %v646 = vmax.f32 %v612, 0.0
        %v647 = vmax.f32 %v625, 0.0
        %v648 = vmax.f32 %v638, 0.0
        %v649 = vpack.c.bf16 %v641, %v641
        %v650 = vpack.c.bf16 %v642, %v642
        %v651 = vpack.c.bf16 %v643, %v643
        %v652 = vpack.c.bf16 %v644, %v644
        %v653 = vpack.c.bf16 %v645, %v645
        %v654 = vpack.c.bf16 %v646, %v646
        %v655 = vpack.c.bf16 %v647, %v647
        %v656 = vpack.c.bf16 %v648, %v648
        %v657 = vld [vmem:[#allocation5] sm:$0xff]
        %v658 = vld [vmem:[#allocation5 + $0x8] sm:$0xff]
        %v659 = vld [vmem:[#allocation5 + $0x10] sm:$0xff]
        %v660 = vld [vmem:[#allocation5 + $0x18] sm:$0xff]
        %v661 = vld [vmem:[#allocation5 + $0x20] sm:$0xff]
        %v662 = vld [vmem:[#allocation5 + $0x28] sm:$0xff]
        %v663 = vld [vmem:[#allocation5 + $0x30] sm:$0xff]
        %v664 = vld [vmem:[#allocation5 + $0x38] sm:$0xff]
        %v665 = vld [vmem:[#allocation5 + $0x40] sm:$0xff]
        %v666 = vld [vmem:[#allocation5 + $0x48] sm:$0xff]
        %v667 = vld [vmem:[#allocation5 + $0x50] sm:$0xff]
        %v668 = vld [vmem:[#allocation5 + $0x58] sm:$0xff]
        %v669 = vld [vmem:[#allocation5 + $0x60] sm:$0xff]
        %v670 = vld [vmem:[#allocation5 + $0x68] sm:$0xff]
        %v671 = vld [vmem:[#allocation5 + $0x70] sm:$0xff]
        %v672 = vld [vmem:[#allocation5 + $0x78] sm:$0xff]
        %v673 = vld [vmem:[#allocation5 + $0x80] sm:$0xff]
        %v674 = vld [vmem:[#allocation5 + $0x88] sm:$0xff]
        %v675 = vld [vmem:[#allocation5 + $0x90] sm:$0xff]
        %v676 = vld [vmem:[#allocation5 + $0x98] sm:$0xff]
        %v677 = vld [vmem:[#allocation5 + $0xa0] sm:$0xff]
        %v678 = vld [vmem:[#allocation5 + $0xa8] sm:$0xff]
        %v679 = vld [vmem:[#allocation5 + $0xb0] sm:$0xff]
        %v680 = vld [vmem:[#allocation5 + $0xb8] sm:$0xff]
        %v681 = vld [vmem:[#allocation5 + $0xc0] sm:$0xff]
        %v682 = vld [vmem:[#allocation5 + $0xc8] sm:$0xff]
        %v683 = vld [vmem:[#allocation5 + $0xd0] sm:$0xff]
        %v684 = vld [vmem:[#allocation5 + $0xd8] sm:$0xff]
        %v685 = vld [vmem:[#allocation5 + $0xe0] sm:$0xff]
        %v686 = vld [vmem:[#allocation5 + $0xe8] sm:$0xff]
        %v687 = vld [vmem:[#allocation5 + $0xf0] sm:$0xff]
        %v688 = vld [vmem:[#allocation5 + $0xf8] sm:$0xff]
        %v689 = vld [vmem:[#allocation5 + $0x100] sm:$0xff]
        %v690 = vld [vmem:[#allocation5 + $0x108] sm:$0xff]
        %v691 = vld [vmem:[#allocation5 + $0x110] sm:$0xff]
        %v692 = vld [vmem:[#allocation5 + $0x118] sm:$0xff]
        %v693 = vld [vmem:[#allocation5 + $0x120] sm:$0xff]
        %v694 = vld [vmem:[#allocation5 + $0x128] sm:$0xff]
        %v695 = vld [vmem:[#allocation5 + $0x130] sm:$0xff]
        %v696 = vld [vmem:[#allocation5 + $0x138] sm:$0xff]
        %v697 = vld [vmem:[#allocation5 + $0x140] sm:$0xff]
        %v698 = vld [vmem:[#allocation5 + $0x148] sm:$0xff]
        %v699 = vld [vmem:[#allocation5 + $0x150] sm:$0xff]
        %v700 = vld [vmem:[#allocation5 + $0x158] sm:$0xff]
        %v701 = vld [vmem:[#allocation5 + $0x160] sm:$0xff]
        %v702 = vld [vmem:[#allocation5 + $0x168] sm:$0xff]
        %v703 = vld [vmem:[#allocation5 + $0x170] sm:$0xff]
        %v704 = vld [vmem:[#allocation5 + $0x178] sm:$0xff]
        %v705 = vld [vmem:[#allocation5 + $0x180] sm:$0xff]
        %v706 = vld [vmem:[#allocation5 + $0x188] sm:$0xff]
        %v707 = vld [vmem:[#allocation5 + $0x190] sm:$0xff]
        %v708 = vld [vmem:[#allocation5 + $0x198] sm:$0xff]
        %v709 = vld [vmem:[#allocation5 + $0x1a0] sm:$0xff]
        %v710 = vld [vmem:[#allocation5 + $0x1a8] sm:$0xff]
        %v711 = vld [vmem:[#allocation5 + $0x1b0] sm:$0xff]
        %v712 = vld [vmem:[#allocation5 + $0x1b8] sm:$0xff]
        %v713 = vld [vmem:[#allocation5 + $0x1c0] sm:$0xff]
        %v714 = vld [vmem:[#allocation5 + $0x1c8] sm:$0xff]
        %v715 = vld [vmem:[#allocation5 + $0x1d0] sm:$0xff]
        %v716 = vld [vmem:[#allocation5 + $0x1d8] sm:$0xff]
        %v717 = vld [vmem:[#allocation5 + $0x1e0] sm:$0xff]
        %v718 = vld [vmem:[#allocation5 + $0x1e8] sm:$0xff]
        %v719 = vld [vmem:[#allocation5 + $0x1f0] sm:$0xff]
        %v720 = vld [vmem:[#allocation5 + $0x1f8] sm:$0xff]
        %v721 = vld [vmem:[#allocation5 + $0x200] sm:$0xff]
        %v722 = vld [vmem:[#allocation5 + $0x208] sm:$0xff]
        %v723 = vld [vmem:[#allocation5 + $0x210] sm:$0xff]
        %v724 = vld [vmem:[#allocation5 + $0x218] sm:$0xff]
        %v725 = vld [vmem:[#allocation5 + $0x220] sm:$0xff]
        %v726 = vld [vmem:[#allocation5 + $0x228] sm:$0xff]
        %v727 = vld [vmem:[#allocation5 + $0x230] sm:$0xff]
        %v728 = vld [vmem:[#allocation5 + $0x238] sm:$0xff]
        %v729 = vld [vmem:[#allocation5 + $0x240] sm:$0xff]
        %v730 = vld [vmem:[#allocation5 + $0x248] sm:$0xff]
        %v731 = vld [vmem:[#allocation5 + $0x250] sm:$0xff]
        %v732 = vld [vmem:[#allocation5 + $0x258] sm:$0xff]
        %v733 = vld [vmem:[#allocation5 + $0x260] sm:$0xff]
        %v734 = vld [vmem:[#allocation5 + $0x268] sm:$0xff]
        %v735 = vld [vmem:[#allocation5 + $0x270] sm:$0xff]
        %v736 = vld [vmem:[#allocation5 + $0x278] sm:$0xff]
        %v737 = vld [vmem:[#allocation5 + $0x280] sm:$0xff]
        %v738 = vld [vmem:[#allocation5 + $0x288] sm:$0xff]
        %v739 = vld [vmem:[#allocation5 + $0x290] sm:$0xff]
        %v740 = vld [vmem:[#allocation5 + $0x298] sm:$0xff]
        %v741 = vld [vmem:[#allocation5 + $0x2a0] sm:$0xff]
        %v742 = vld [vmem:[#allocation5 + $0x2a8] sm:$0xff]
        %v743 = vld [vmem:[#allocation5 + $0x2b0] sm:$0xff]
        %v744 = vld [vmem:[#allocation5 + $0x2b8] sm:$0xff]
        %v745 = vld [vmem:[#allocation5 + $0x2c0] sm:$0xff]
        %v746 = vld [vmem:[#allocation5 + $0x2c8] sm:$0xff]
        %v747 = vld [vmem:[#allocation5 + $0x2d0] sm:$0xff]
        %v748 = vld [vmem:[#allocation5 + $0x2d8] sm:$0xff]
        %v749 = vld [vmem:[#allocation5 + $0x2e0] sm:$0xff]
        %v750 = vld [vmem:[#allocation5 + $0x2e8] sm:$0xff]
        %v751 = vld [vmem:[#allocation5 + $0x2f0] sm:$0xff]
        %v752 = vld [vmem:[#allocation5 + $0x2f8] sm:$0xff]
        %v753 = vld [vmem:[#allocation5 + $0x300] sm:$0xff]
        %v754 = vld [vmem:[#allocation5 + $0x308] sm:$0xff]
        %v755 = vld [vmem:[#allocation5 + $0x310] sm:$0xff]
        %v756 = vld [vmem:[#allocation5 + $0x318] sm:$0xff]
        %v757 = vld [vmem:[#allocation5 + $0x320] sm:$0xff]
        %v758 = vld [vmem:[#allocation5 + $0x328] sm:$0xff]
        %v759 = vld [vmem:[#allocation5 + $0x330] sm:$0xff]
        %v760 = vld [vmem:[#allocation5 + $0x338] sm:$0xff]
        %v761 = vld [vmem:[#allocation5 + $0x340] sm:$0xff]
        %v762 = vld [vmem:[#allocation5 + $0x348] sm:$0xff]
        %v763 = vld [vmem:[#allocation5 + $0x350] sm:$0xff]
        %v764 = vld [vmem:[#allocation5 + $0x358] sm:$0xff]
        %v765 = vld [vmem:[#allocation5 + $0x360] sm:$0xff]
        %v766 = vld [vmem:[#allocation5 + $0x368] sm:$0xff]
        %v767 = vld [vmem:[#allocation5 + $0x370] sm:$0xff]
        %v768 = vld [vmem:[#allocation5 + $0x378] sm:$0xff]
        %v769 = vld [vmem:[#allocation5 + $0x380] sm:$0xff]
        %v770 = vld [vmem:[#allocation5 + $0x388] sm:$0xff]
        %v771 = vld [vmem:[#allocation5 + $0x390] sm:$0xff]
        %v772 = vld [vmem:[#allocation5 + $0x398] sm:$0xff]
        %v773 = vld [vmem:[#allocation5 + $0x3a0] sm:$0xff]
        %v774 = vld [vmem:[#allocation5 + $0x3a8] sm:$0xff]
        %v775 = vld [vmem:[#allocation5 + $0x3b0] sm:$0xff]
        %v776 = vld [vmem:[#allocation5 + $0x3b8] sm:$0xff]
        %v777 = vld [vmem:[#allocation5 + $0x3c0] sm:$0xff]
        %v778 = vld [vmem:[#allocation5 + $0x3c8] sm:$0xff]
        %v779 = vld [vmem:[#allocation5 + $0x3d0] sm:$0xff]
        %v780 = vld [vmem:[#allocation5 + $0x3d8] sm:$0xff]
        %v781 = vld [vmem:[#allocation5 + $0x3e0] sm:$0xff]
        %v782 = vld [vmem:[#allocation5 + $0x3e8] sm:$0xff]
        %v783 = vld [vmem:[#allocation5 + $0x3f0] sm:$0xff]
        %v784 = vld [vmem:[#allocation5 + $0x3f8] sm:$0xff]
        %v785 = vld [vmem:[#allocation5 + $0x400] sm:$0xff]
        %v786 = vld [vmem:[#allocation5 + $0x408] sm:$0xff]
        %v787 = vld [vmem:[#allocation5 + $0x410] sm:$0xff]
        %v788 = vld [vmem:[#allocation5 + $0x418] sm:$0xff]
        %v789 = vld [vmem:[#allocation5 + $0x420] sm:$0xff]
        %v790 = vld [vmem:[#allocation5 + $0x428] sm:$0xff]
        %v791 = vld [vmem:[#allocation5 + $0x430] sm:$0xff]
        %v792 = vld [vmem:[#allocation5 + $0x438] sm:$0xff]
        %v793 = vld [vmem:[#allocation5 + $0x440] sm:$0xff]
        %v794 = vld [vmem:[#allocation5 + $0x448] sm:$0xff]
        %v795 = vld [vmem:[#allocation5 + $0x450] sm:$0xff]
        %v796 = vld [vmem:[#allocation5 + $0x458] sm:$0xff]
        %v797 = vld [vmem:[#allocation5 + $0x460] sm:$0xff]
        %v798 = vld [vmem:[#allocation5 + $0x468] sm:$0xff]
        %v799 = vld [vmem:[#allocation5 + $0x470] sm:$0xff]
        %v800 = vld [vmem:[#allocation5 + $0x478] sm:$0xff]
        %v801 = vld [vmem:[#allocation5 + $0x480] sm:$0xff]
        %v802 = vld [vmem:[#allocation5 + $0x488] sm:$0xff]
        %v803 = vld [vmem:[#allocation5 + $0x490] sm:$0xff]
        %v804 = vld [vmem:[#allocation5 + $0x498] sm:$0xff]
        %v805 = vld [vmem:[#allocation5 + $0x4a0] sm:$0xff]
        %v806 = vld [vmem:[#allocation5 + $0x4a8] sm:$0xff]
        %v807 = vld [vmem:[#allocation5 + $0x4b0] sm:$0xff]
        %v808 = vld [vmem:[#allocation5 + $0x4b8] sm:$0xff]
        %v809 = vld [vmem:[#allocation5 + $0x4c0] sm:$0xff]
        %v810 = vld [vmem:[#allocation5 + $0x4c8] sm:$0xff]
        %v811 = vld [vmem:[#allocation5 + $0x4d0] sm:$0xff]
        %v812 = vld [vmem:[#allocation5 + $0x4d8] sm:$0xff]
        %v813 = vld [vmem:[#allocation5 + $0x4e0] sm:$0xff]
        %v814 = vld [vmem:[#allocation5 + $0x4e8] sm:$0xff]
        %v815 = vld [vmem:[#allocation5 + $0x4f0] sm:$0xff]
        %v816 = vld [vmem:[#allocation5 + $0x4f8] sm:$0xff]
        %v817 = vld [vmem:[#allocation5 + $0x500] sm:$0xff]
        %v818 = vld [vmem:[#allocation5 + $0x508] sm:$0xff]
        %v819 = vld [vmem:[#allocation5 + $0x510] sm:$0xff]
        %v820 = vld [vmem:[#allocation5 + $0x518] sm:$0xff]
        %v821 = vld [vmem:[#allocation5 + $0x520] sm:$0xff]
        %v822 = vld [vmem:[#allocation5 + $0x528] sm:$0xff]
        %v823 = vld [vmem:[#allocation5 + $0x530] sm:$0xff]
        %v824 = vld [vmem:[#allocation5 + $0x538] sm:$0xff]
        %v825 = vld [vmem:[#allocation5 + $0x540] sm:$0xff]
        %v826 = vld [vmem:[#allocation5 + $0x548] sm:$0xff]
        %v827 = vld [vmem:[#allocation5 + $0x550] sm:$0xff]
        %v828 = vld [vmem:[#allocation5 + $0x558] sm:$0xff]
        %v829 = vld [vmem:[#allocation5 + $0x560] sm:$0xff]
        %v830 = vld [vmem:[#allocation5 + $0x568] sm:$0xff]
        %v831 = vld [vmem:[#allocation5 + $0x570] sm:$0xff]
        %v832 = vld [vmem:[#allocation5 + $0x578] sm:$0xff]
        %v833 = vld [vmem:[#allocation5 + $0x580] sm:$0xff]
        %v834 = vld [vmem:[#allocation5 + $0x588] sm:$0xff]
        %v835 = vld [vmem:[#allocation5 + $0x590] sm:$0xff]
        %v836 = vld [vmem:[#allocation5 + $0x598] sm:$0xff]
        %v837 = vld [vmem:[#allocation5 + $0x5a0] sm:$0xff]
        %v838 = vld [vmem:[#allocation5 + $0x5a8] sm:$0xff]
        %v839 = vld [vmem:[#allocation5 + $0x5b0] sm:$0xff]
        %v840 = vld [vmem:[#allocation5 + $0x5b8] sm:$0xff]
        %v841 = vld [vmem:[#allocation5 + $0x5c0] sm:$0xff]
        %v842 = vld [vmem:[#allocation5 + $0x5c8] sm:$0xff]
        %v843 = vld [vmem:[#allocation5 + $0x5d0] sm:$0xff]
        %v844 = vld [vmem:[#allocation5 + $0x5d8] sm:$0xff]
        %v845 = vld [vmem:[#allocation5 + $0x5e0] sm:$0xff]
        %v846 = vld [vmem:[#allocation5 + $0x5e8] sm:$0xff]
        %v847 = vld [vmem:[#allocation5 + $0x5f0] sm:$0xff]
        %v848 = vld [vmem:[#allocation5 + $0x5f8] sm:$0xff]
        %v849 = vld [vmem:[#allocation5 + $0x600] sm:$0xff]
        %v850 = vld [vmem:[#allocation5 + $0x608] sm:$0xff]
        %v851 = vld [vmem:[#allocation5 + $0x610] sm:$0xff]
        %v852 = vld [vmem:[#allocation5 + $0x618] sm:$0xff]
        %v853 = vld [vmem:[#allocation5 + $0x620] sm:$0xff]
        %v854 = vld [vmem:[#allocation5 + $0x628] sm:$0xff]
        %v855 = vld [vmem:[#allocation5 + $0x630] sm:$0xff]
        %v856 = vld [vmem:[#allocation5 + $0x638] sm:$0xff]
        %v857 = vld [vmem:[#allocation5 + $0x640] sm:$0xff]
        %v858 = vld [vmem:[#allocation5 + $0x648] sm:$0xff]
        %v859 = vld [vmem:[#allocation5 + $0x650] sm:$0xff]
        %v860 = vld [vmem:[#allocation5 + $0x658] sm:$0xff]
        %v861 = vld [vmem:[#allocation5 + $0x660] sm:$0xff]
        %v862 = vld [vmem:[#allocation5 + $0x668] sm:$0xff]
        %v863 = vld [vmem:[#allocation5 + $0x670] sm:$0xff]
        %v864 = vld [vmem:[#allocation5 + $0x678] sm:$0xff]
        %v865 = vld [vmem:[#allocation5 + $0x680] sm:$0xff]
        %v866 = vld [vmem:[#allocation5 + $0x688] sm:$0xff]
        %v867 = vld [vmem:[#allocation5 + $0x690] sm:$0xff]
        %v868 = vld [vmem:[#allocation5 + $0x698] sm:$0xff]
        %v869 = vld [vmem:[#allocation5 + $0x6a0] sm:$0xff]
        %v870 = vld [vmem:[#allocation5 + $0x6a8] sm:$0xff]
        %v871 = vld [vmem:[#allocation5 + $0x6b0] sm:$0xff]
        %v872 = vld [vmem:[#allocation5 + $0x6b8] sm:$0xff]
        %v873 = vld [vmem:[#allocation5 + $0x6c0] sm:$0xff]
        %v874 = vld [vmem:[#allocation5 + $0x6c8] sm:$0xff]
        %v875 = vld [vmem:[#allocation5 + $0x6d0] sm:$0xff]
        %v876 = vld [vmem:[#allocation5 + $0x6d8] sm:$0xff]
        %v877 = vld [vmem:[#allocation5 + $0x6e0] sm:$0xff]
        %v878 = vld [vmem:[#allocation5 + $0x6e8] sm:$0xff]
        %v879 = vld [vmem:[#allocation5 + $0x6f0] sm:$0xff]
        %v880 = vld [vmem:[#allocation5 + $0x6f8] sm:$0xff]
        %v881 = vld [vmem:[#allocation5 + $0x700] sm:$0xff]
        %v882 = vld [vmem:[#allocation5 + $0x708] sm:$0xff]
        %v883 = vld [vmem:[#allocation5 + $0x710] sm:$0xff]
        %v884 = vld [vmem:[#allocation5 + $0x718] sm:$0xff]
        %v885 = vld [vmem:[#allocation5 + $0x720] sm:$0xff]
        %v886 = vld [vmem:[#allocation5 + $0x728] sm:$0xff]
        %v887 = vld [vmem:[#allocation5 + $0x730] sm:$0xff]
        %v888 = vld [vmem:[#allocation5 + $0x738] sm:$0xff]
        %v889 = vld [vmem:[#allocation5 + $0x740] sm:$0xff]
        %v890 = vld [vmem:[#allocation5 + $0x748] sm:$0xff]
        %v891 = vld [vmem:[#allocation5 + $0x750] sm:$0xff]
        %v892 = vld [vmem:[#allocation5 + $0x758] sm:$0xff]
        %v893 = vld [vmem:[#allocation5 + $0x760] sm:$0xff]
        %v894 = vld [vmem:[#allocation5 + $0x768] sm:$0xff]
        %v895 = vld [vmem:[#allocation5 + $0x770] sm:$0xff]
        %v896 = vld [vmem:[#allocation5 + $0x778] sm:$0xff]
        %v897 = vld [vmem:[#allocation5 + $0x780] sm:$0xff]
        %v898 = vld [vmem:[#allocation5 + $0x788] sm:$0xff]
        %v899 = vld [vmem:[#allocation5 + $0x790] sm:$0xff]
        %v900 = vld [vmem:[#allocation5 + $0x798] sm:$0xff]
        %v901 = vld [vmem:[#allocation5 + $0x7a0] sm:$0xff]
        %v902 = vld [vmem:[#allocation5 + $0x7a8] sm:$0xff]
        %v903 = vld [vmem:[#allocation5 + $0x7b0] sm:$0xff]
        %v904 = vld [vmem:[#allocation5 + $0x7b8] sm:$0xff]
        %v905 = vld [vmem:[#allocation5 + $0x7c0] sm:$0xff]
        %v906 = vld [vmem:[#allocation5 + $0x7c8] sm:$0xff]
        %v907 = vld [vmem:[#allocation5 + $0x7d0] sm:$0xff]
        %v908 = vld [vmem:[#allocation5 + $0x7d8] sm:$0xff]
        %v909 = vld [vmem:[#allocation5 + $0x7e0] sm:$0xff]
        %v910 = vld [vmem:[#allocation5 + $0x7e8] sm:$0xff]
        %v911 = vld [vmem:[#allocation5 + $0x7f0] sm:$0xff]
        %v912 = vld [vmem:[#allocation5 + $0x7f8] sm:$0xff]
        %v913 = vld [vmem:[%s4] sm:$0xf]
        %v915 = vperm.slane %v913, 0
        %v916 = vperm.slane %v913, 1
        %v917 = vperm.slane %v913, 2
        %v918 = vperm.slane %v913, 3
        %v1179 = vunpack.c.l.b16 %v657
        %v1180 = vunpack.c.h.b16 %v657
        %v1181 = vunpack.c.l.b16 %v658
        %v1182 = vunpack.c.h.b16 %v658
        %v1183 = vunpack.c.l.b16 %v659
        %v1184 = vunpack.c.h.b16 %v659
        %v1185 = vunpack.c.l.b16 %v660
        %v1186 = vunpack.c.h.b16 %v660
        %v1187 = vunpack.c.l.b16 %v661
        %v1188 = vunpack.c.h.b16 %v661
        %v1189 = vunpack.c.l.b16 %v662
        %v1190 = vunpack.c.h.b16 %v662
        %v1191 = vunpack.c.l.b16 %v663
        %v1192 = vunpack.c.h.b16 %v663
        %v1193 = vunpack.c.l.b16 %v664
        %v1194 = vunpack.c.h.b16 %v664
        %v1195 = vunpack.c.l.b16 %v665
        %v1196 = vunpack.c.h.b16 %v665
        %v1197 = vunpack.c.l.b16 %v666
        %v1198 = vunpack.c.h.b16 %v666
        %v1199 = vunpack.c.l.b16 %v667
        %v1200 = vunpack.c.h.b16 %v667
        %v1201 = vunpack.c.l.b16 %v668
        %v1202 = vunpack.c.h.b16 %v668
        %v1203 = vunpack.c.l.b16 %v669
        %v1204 = vunpack.c.h.b16 %v669
        %v1205 = vunpack.c.l.b16 %v670
        %v1206 = vunpack.c.h.b16 %v670
        %v1207 = vunpack.c.l.b16 %v671
        %v1208 = vunpack.c.h.b16 %v671
        %v1209 = vunpack.c.l.b16 %v672
        %v1210 = vunpack.c.h.b16 %v672
        %v1211 = vunpack.c.l.b16 %v673
        %v1212 = vunpack.c.h.b16 %v673
        %v1213 = vunpack.c.l.b16 %v674
        %v1214 = vunpack.c.h.b16 %v674
        %v1215 = vunpack.c.l.b16 %v675
        %v1216 = vunpack.c.h.b16 %v675
        %v1217 = vunpack.c.l.b16 %v676
        %v1218 = vunpack.c.h.b16 %v676
        %v1219 = vunpack.c.l.b16 %v677
        %v1220 = vunpack.c.h.b16 %v677
        %v1221 = vunpack.c.l.b16 %v678
        %v1222 = vunpack.c.h.b16 %v678
        %v1223 = vunpack.c.l.b16 %v679
        %v1224 = vunpack.c.h.b16 %v679
        %v1225 = vunpack.c.l.b16 %v680
        %v1226 = vunpack.c.h.b16 %v680
        %v1227 = vunpack.c.l.b16 %v681
        %v1228 = vunpack.c.h.b16 %v681
        %v1229 = vunpack.c.l.b16 %v682
        %v1230 = vunpack.c.h.b16 %v682
        %v1231 = vunpack.c.l.b16 %v683
        %v1232 = vunpack.c.h.b16 %v683
        %v1233 = vunpack.c.l.b16 %v684
        %v1234 = vunpack.c.h.b16 %v684
        %v1235 = vunpack.c.l.b16 %v685
        %v1236 = vunpack.c.h.b16 %v685
        %v1237 = vunpack.c.l.b16 %v686
        %v1238 = vunpack.c.h.b16 %v686
        %v1239 = vunpack.c.l.b16 %v687
        %v1240 = vunpack.c.h.b16 %v687
        %v1241 = vunpack.c.l.b16 %v688
        %v1242 = vunpack.c.h.b16 %v688
        %v1243 = vunpack.c.l.b16 %v689
        %v1244 = vunpack.c.h.b16 %v689
        %v1245 = vunpack.c.l.b16 %v690
        %v1246 = vunpack.c.h.b16 %v690
        %v1247 = vunpack.c.l.b16 %v691
        %v1248 = vunpack.c.h.b16 %v691
        %v1249 = vunpack.c.l.b16 %v692
        %v1250 = vunpack.c.h.b16 %v692
        %v1251 = vunpack.c.l.b16 %v693
        %v1252 = vunpack.c.h.b16 %v693
        %v1253 = vunpack.c.l.b16 %v694
        %v1254 = vunpack.c.h.b16 %v694
        %v1255 = vunpack.c.l.b16 %v695
        %v1256 = vunpack.c.h.b16 %v695
        %v1257 = vunpack.c.l.b16 %v696
        %v1258 = vunpack.c.h.b16 %v696
        %v1259 = vunpack.c.l.b16 %v697
        %v1260 = vunpack.c.h.b16 %v697
        %v1261 = vunpack.c.l.b16 %v698
        %v1262 = vunpack.c.h.b16 %v698
        %v1263 = vunpack.c.l.b16 %v699
        %v1264 = vunpack.c.h.b16 %v699
        %v1265 = vunpack.c.l.b16 %v700
        %v1266 = vunpack.c.h.b16 %v700
        %v1267 = vunpack.c.l.b16 %v701
        %v1268 = vunpack.c.h.b16 %v701
        %v1269 = vunpack.c.l.b16 %v702
        %v1270 = vunpack.c.h.b16 %v702
        %v1271 = vunpack.c.l.b16 %v703
        %v1272 = vunpack.c.h.b16 %v703
        %v1273 = vunpack.c.l.b16 %v704
        %v1274 = vunpack.c.h.b16 %v704
        %v1275 = vunpack.c.l.b16 %v705
        %v1276 = vunpack.c.h.b16 %v705
        %v1277 = vunpack.c.l.b16 %v706
        %v1278 = vunpack.c.h.b16 %v706
        %v1279 = vunpack.c.l.b16 %v707
        %v1280 = vunpack.c.h.b16 %v707
        %v1281 = vunpack.c.l.b16 %v708
        %v1282 = vunpack.c.h.b16 %v708
        %v1283 = vunpack.c.l.b16 %v709
        %v1284 = vunpack.c.h.b16 %v709
        %v1285 = vunpack.c.l.b16 %v710
        %v1286 = vunpack.c.h.b16 %v710
        %v1287 = vunpack.c.l.b16 %v711
        %v1288 = vunpack.c.h.b16 %v711
        %v1289 = vunpack.c.l.b16 %v712
        %v1290 = vunpack.c.h.b16 %v712
        %v1291 = vunpack.c.l.b16 %v713
        %v1292 = vunpack.c.h.b16 %v713
        %v1293 = vunpack.c.l.b16 %v714
        %v1294 = vunpack.c.h.b16 %v714
        %v1295 = vunpack.c.l.b16 %v715
        %v1296 = vunpack.c.h.b16 %v715
        %v1297 = vunpack.c.l.b16 %v716
        %v1298 = vunpack.c.h.b16 %v716
        %v1299 = vunpack.c.l.b16 %v717
        %v1300 = vunpack.c.h.b16 %v717
        %v1301 = vunpack.c.l.b16 %v718
        %v1302 = vunpack.c.h.b16 %v718
        %v1303 = vunpack.c.l.b16 %v719
        %v1304 = vunpack.c.h.b16 %v719
        %v1305 = vunpack.c.l.b16 %v720
        %v1306 = vunpack.c.h.b16 %v720
        %v1307 = vunpack.c.l.b16 %v721
        %v1308 = vunpack.c.h.b16 %v721
        %v1309 = vunpack.c.l.b16 %v722
        %v1310 = vunpack.c.h.b16 %v722
        %v1311 = vunpack.c.l.b16 %v723
        %v1312 = vunpack.c.h.b16 %v723
        %v1313 = vunpack.c.l.b16 %v724
        %v1314 = vunpack.c.h.b16 %v724
        %v1315 = vunpack.c.l.b16 %v725
        %v1316 = vunpack.c.h.b16 %v725
        %v1317 = vunpack.c.l.b16 %v726
        %v1318 = vunpack.c.h.b16 %v726
        %v1319 = vunpack.c.l.b16 %v727
        %v1320 = vunpack.c.h.b16 %v727
        %v1321 = vunpack.c.l.b16 %v728
        %v1322 = vunpack.c.h.b16 %v728
        %v1323 = vunpack.c.l.b16 %v729
        %v1324 = vunpack.c.h.b16 %v729
        %v1325 = vunpack.c.l.b16 %v730
        %v1326 = vunpack.c.h.b16 %v730
        %v1327 = vunpack.c.l.b16 %v731
        %v1328 = vunpack.c.h.b16 %v731
        %v1329 = vunpack.c.l.b16 %v732
        %v1330 = vunpack.c.h.b16 %v732
        %v1331 = vunpack.c.l.b16 %v733
        %v1332 = vunpack.c.h.b16 %v733
        %v1333 = vunpack.c.l.b16 %v734
        %v1334 = vunpack.c.h.b16 %v734
        %v1335 = vunpack.c.l.b16 %v735
        %v1336 = vunpack.c.h.b16 %v735
        %v1337 = vunpack.c.l.b16 %v736
        %v1338 = vunpack.c.h.b16 %v736
        %v1339 = vunpack.c.l.b16 %v737
        %v1340 = vunpack.c.h.b16 %v737
        %v1341 = vunpack.c.l.b16 %v738
        %v1342 = vunpack.c.h.b16 %v738
        %v1343 = vunpack.c.l.b16 %v739
        %v1344 = vunpack.c.h.b16 %v739
        %v1345 = vunpack.c.l.b16 %v740
        %v1346 = vunpack.c.h.b16 %v740
        %v1347 = vunpack.c.l.b16 %v741
        %v1348 = vunpack.c.h.b16 %v741
        %v1349 = vunpack.c.l.b16 %v742
        %v1350 = vunpack.c.h.b16 %v742
        %v1351 = vunpack.c.l.b16 %v743
        %v1352 = vunpack.c.h.b16 %v743
        %v1353 = vunpack.c.l.b16 %v744
        %v1354 = vunpack.c.h.b16 %v744
        %v1355 = vunpack.c.l.b16 %v745
        %v1356 = vunpack.c.h.b16 %v745
        %v1357 = vunpack.c.l.b16 %v746
        %v1358 = vunpack.c.h.b16 %v746
        %v1359 = vunpack.c.l.b16 %v747
        %v1360 = vunpack.c.h.b16 %v747
        %v1361 = vunpack.c.l.b16 %v748
        %v1362 = vunpack.c.h.b16 %v748
        %v1363 = vunpack.c.l.b16 %v749
        %v1364 = vunpack.c.h.b16 %v749
        %v1365 = vunpack.c.l.b16 %v750
        %v1366 = vunpack.c.h.b16 %v750
        %v1367 = vunpack.c.l.b16 %v751
        %v1368 = vunpack.c.h.b16 %v751
        %v1369 = vunpack.c.l.b16 %v752
        %v1370 = vunpack.c.h.b16 %v752
        %v1371 = vunpack.c.l.b16 %v753
        %v1372 = vunpack.c.h.b16 %v753
        %v1373 = vunpack.c.l.b16 %v754
        %v1374 = vunpack.c.h.b16 %v754
        %v1375 = vunpack.c.l.b16 %v755
        %v1376 = vunpack.c.h.b16 %v755
        %v1377 = vunpack.c.l.b16 %v756
        %v1378 = vunpack.c.h.b16 %v756
        %v1379 = vunpack.c.l.b16 %v757
        %v1380 = vunpack.c.h.b16 %v757
        %v1381 = vunpack.c.l.b16 %v758
        %v1382 = vunpack.c.h.b16 %v758
        %v1383 = vunpack.c.l.b16 %v759
        %v1384 = vunpack.c.h.b16 %v759
        %v1385 = vunpack.c.l.b16 %v760
        %v1386 = vunpack.c.h.b16 %v760
        %v1387 = vunpack.c.l.b16 %v761
        %v1388 = vunpack.c.h.b16 %v761
        %v1389 = vunpack.c.l.b16 %v762
        %v1390 = vunpack.c.h.b16 %v762
        %v1391 = vunpack.c.l.b16 %v763
        %v1392 = vunpack.c.h.b16 %v763
        %v1393 = vunpack.c.l.b16 %v764
        %v1394 = vunpack.c.h.b16 %v764
        %v1395 = vunpack.c.l.b16 %v765
        %v1396 = vunpack.c.h.b16 %v765
        %v1397 = vunpack.c.l.b16 %v766
        %v1398 = vunpack.c.h.b16 %v766
        %v1399 = vunpack.c.l.b16 %v767
        %v1400 = vunpack.c.h.b16 %v767
        %v1401 = vunpack.c.l.b16 %v768
        %v1402 = vunpack.c.h.b16 %v768
        %v1403 = vunpack.c.l.b16 %v769
        %v1404 = vunpack.c.h.b16 %v769
        %v1405 = vunpack.c.l.b16 %v770
        %v1406 = vunpack.c.h.b16 %v770
        %v1407 = vunpack.c.l.b16 %v771
        %v1408 = vunpack.c.h.b16 %v771
        %v1409 = vunpack.c.l.b16 %v772
        %v1410 = vunpack.c.h.b16 %v772
        %v1411 = vunpack.c.l.b16 %v773
        %v1412 = vunpack.c.h.b16 %v773
        %v1413 = vunpack.c.l.b16 %v774
        %v1414 = vunpack.c.h.b16 %v774
        %v1415 = vunpack.c.l.b16 %v775
        %v1416 = vunpack.c.h.b16 %v775
        %v1417 = vunpack.c.l.b16 %v776
        %v1418 = vunpack.c.h.b16 %v776
        %v1419 = vunpack.c.l.b16 %v777
        %v1420 = vunpack.c.h.b16 %v777
        %v1421 = vunpack.c.l.b16 %v778
        %v1422 = vunpack.c.h.b16 %v778
        %v1423 = vunpack.c.l.b16 %v779
        %v1424 = vunpack.c.h.b16 %v779
        %v1425 = vunpack.c.l.b16 %v780
        %v1426 = vunpack.c.h.b16 %v780
        %v1427 = vunpack.c.l.b16 %v781
        %v1428 = vunpack.c.h.b16 %v781
        %v1429 = vunpack.c.l.b16 %v782
        %v1430 = vunpack.c.h.b16 %v782
        %v1431 = vunpack.c.l.b16 %v783
        %v1432 = vunpack.c.h.b16 %v783
        %v1433 = vunpack.c.l.b16 %v784
        %v1434 = vunpack.c.h.b16 %v784
        %v1435 = vunpack.c.l.b16 %v785
        %v1436 = vunpack.c.h.b16 %v785
        %v1437 = vunpack.c.l.b16 %v786
        %v1438 = vunpack.c.h.b16 %v786
        %v1439 = vunpack.c.l.b16 %v787
        %v1440 = vunpack.c.h.b16 %v787
        %v1441 = vunpack.c.l.b16 %v788
        %v1442 = vunpack.c.h.b16 %v788
        %v1443 = vunpack.c.l.b16 %v789
        %v1444 = vunpack.c.h.b16 %v789
        %v1445 = vunpack.c.l.b16 %v790
        %v1446 = vunpack.c.h.b16 %v790
        %v1447 = vunpack.c.l.b16 %v791
        %v1448 = vunpack.c.h.b16 %v791
        %v1449 = vunpack.c.l.b16 %v792
        %v1450 = vunpack.c.h.b16 %v792
        %v1451 = vunpack.c.l.b16 %v793
        %v1452 = vunpack.c.h.b16 %v793
        %v1453 = vunpack.c.l.b16 %v794
        %v1454 = vunpack.c.h.b16 %v794
        %v1455 = vunpack.c.l.b16 %v795
        %v1456 = vunpack.c.h.b16 %v795
        %v1457 = vunpack.c.l.b16 %v796
        %v1458 = vunpack.c.h.b16 %v796
        %v1459 = vunpack.c.l.b16 %v797
        %v1460 = vunpack.c.h.b16 %v797
        %v1461 = vunpack.c.l.b16 %v798
        %v1462 = vunpack.c.h.b16 %v798
        %v1463 = vunpack.c.l.b16 %v799
        %v1464 = vunpack.c.h.b16 %v799
        %v1465 = vunpack.c.l.b16 %v800
        %v1466 = vunpack.c.h.b16 %v800
        %v1467 = vunpack.c.l.b16 %v801
        %v1468 = vunpack.c.h.b16 %v801
        %v1469 = vunpack.c.l.b16 %v802
        %v1470 = vunpack.c.h.b16 %v802
        %v1471 = vunpack.c.l.b16 %v803
        %v1472 = vunpack.c.h.b16 %v803
        %v1473 = vunpack.c.l.b16 %v804
        %v1474 = vunpack.c.h.b16 %v804
        %v1475 = vunpack.c.l.b16 %v805
        %v1476 = vunpack.c.h.b16 %v805
        %v1477 = vunpack.c.l.b16 %v806
        %v1478 = vunpack.c.h.b16 %v806
        %v1479 = vunpack.c.l.b16 %v807
        %v1480 = vunpack.c.h.b16 %v807
        %v1481 = vunpack.c.l.b16 %v808
        %v1482 = vunpack.c.h.b16 %v808
        %v1483 = vunpack.c.l.b16 %v809
        %v1484 = vunpack.c.h.b16 %v809
        %v1485 = vunpack.c.l.b16 %v810
        %v1486 = vunpack.c.h.b16 %v810
        %v1487 = vunpack.c.l.b16 %v811
        %v1488 = vunpack.c.h.b16 %v811
        %v1489 = vunpack.c.l.b16 %v812
        %v1490 = vunpack.c.h.b16 %v812
        %v1491 = vunpack.c.l.b16 %v813
        %v1492 = vunpack.c.h.b16 %v813
        %v1493 = vunpack.c.l.b16 %v814
        %v1494 = vunpack.c.h.b16 %v814
        %v1495 = vunpack.c.l.b16 %v815
        %v1496 = vunpack.c.h.b16 %v815
        %v1497 = vunpack.c.l.b16 %v816
        %v1498 = vunpack.c.h.b16 %v816
        %v1499 = vunpack.c.l.b16 %v817
        %v1500 = vunpack.c.h.b16 %v817
        %v1501 = vunpack.c.l.b16 %v818
        %v1502 = vunpack.c.h.b16 %v818
        %v1503 = vunpack.c.l.b16 %v819
        %v1504 = vunpack.c.h.b16 %v819
        %v1505 = vunpack.c.l.b16 %v820
        %v1506 = vunpack.c.h.b16 %v820
        %v1507 = vunpack.c.l.b16 %v821
        %v1508 = vunpack.c.h.b16 %v821
        %v1509 = vunpack.c.l.b16 %v822
        %v1510 = vunpack.c.h.b16 %v822
        %v1511 = vunpack.c.l.b16 %v823
        %v1512 = vunpack.c.h.b16 %v823
        %v1513 = vunpack.c.l.b16 %v824
        %v1514 = vunpack.c.h.b16 %v824
        %v1515 = vunpack.c.l.b16 %v825
        %v1516 = vunpack.c.h.b16 %v825
        %v1517 = vunpack.c.l.b16 %v826
        %v1518 = vunpack.c.h.b16 %v826
        %v1519 = vunpack.c.l.b16 %v827
        %v1520 = vunpack.c.h.b16 %v827
        %v1521 = vunpack.c.l.b16 %v828
        %v1522 = vunpack.c.h.b16 %v828
        %v1523 = vunpack.c.l.b16 %v829
        %v1524 = vunpack.c.h.b16 %v829
        %v1525 = vunpack.c.l.b16 %v830
        %v1526 = vunpack.c.h.b16 %v830
        %v1527 = vunpack.c.l.b16 %v831
        %v1528 = vunpack.c.h.b16 %v831
        %v1529 = vunpack.c.l.b16 %v832
        %v1530 = vunpack.c.h.b16 %v832
        %v1531 = vunpack.c.l.b16 %v833
        %v1532 = vunpack.c.h.b16 %v833
        %v1533 = vunpack.c.l.b16 %v834
        %v1534 = vunpack.c.h.b16 %v834
        %v1535 = vunpack.c.l.b16 %v835
        %v1536 = vunpack.c.h.b16 %v835
        %v1537 = vunpack.c.l.b16 %v836
        %v1538 = vunpack.c.h.b16 %v836
        %v1539 = vunpack.c.l.b16 %v837
        %v1540 = vunpack.c.h.b16 %v837
        %v1541 = vunpack.c.l.b16 %v838
        %v1542 = vunpack.c.h.b16 %v838
        %v1543 = vunpack.c.l.b16 %v839
        %v1544 = vunpack.c.h.b16 %v839
        %v1545 = vunpack.c.l.b16 %v840
        %v1546 = vunpack.c.h.b16 %v840
        %v1547 = vunpack.c.l.b16 %v841
        %v1548 = vunpack.c.h.b16 %v841
        %v1549 = vunpack.c.l.b16 %v842
        %v1550 = vunpack.c.h.b16 %v842
        %v1551 = vunpack.c.l.b16 %v843
        %v1552 = vunpack.c.h.b16 %v843
        %v1553 = vunpack.c.l.b16 %v844
        %v1554 = vunpack.c.h.b16 %v844
        %v1555 = vunpack.c.l.b16 %v845
        %v1556 = vunpack.c.h.b16 %v845
        %v1557 = vunpack.c.l.b16 %v846
        %v1558 = vunpack.c.h.b16 %v846
        %v1559 = vunpack.c.l.b16 %v847
        %v1560 = vunpack.c.h.b16 %v847
        %v1561 = vunpack.c.l.b16 %v848
        %v1562 = vunpack.c.h.b16 %v848
        %v1563 = vunpack.c.l.b16 %v849
        %v1564 = vunpack.c.h.b16 %v849
        %v1565 = vunpack.c.l.b16 %v850
        %v1566 = vunpack.c.h.b16 %v850
        %v1567 = vunpack.c.l.b16 %v851
        %v1568 = vunpack.c.h.b16 %v851
        %v1569 = vunpack.c.l.b16 %v852
        %v1570 = vunpack.c.h.b16 %v852
        %v1571 = vunpack.c.l.b16 %v853
        %v1572 = vunpack.c.h.b16 %v853
        %v1573 = vunpack.c.l.b16 %v854
        %v1574 = vunpack.c.h.b16 %v854
        %v1575 = vunpack.c.l.b16 %v855
        %v1576 = vunpack.c.h.b16 %v855
        %v1577 = vunpack.c.l.b16 %v856
        %v1578 = vunpack.c.h.b16 %v856
        %v1579 = vunpack.c.l.b16 %v857
        %v1580 = vunpack.c.h.b16 %v857
        %v1581 = vunpack.c.l.b16 %v858
        %v1582 = vunpack.c.h.b16 %v858
        %v1583 = vunpack.c.l.b16 %v859
        %v1584 = vunpack.c.h.b16 %v859
        %v1585 = vunpack.c.l.b16 %v860
        %v1586 = vunpack.c.h.b16 %v860
        %v1587 = vunpack.c.l.b16 %v861
        %v1588 = vunpack.c.h.b16 %v861
        %v1589 = vunpack.c.l.b16 %v862
        %v1590 = vunpack.c.h.b16 %v862
        %v1591 = vunpack.c.l.b16 %v863
        %v1592 = vunpack.c.h.b16 %v863
        %v1593 = vunpack.c.l.b16 %v864
        %v1594 = vunpack.c.h.b16 %v864
        %v1595 = vunpack.c.l.b16 %v865
        %v1596 = vunpack.c.h.b16 %v865
        %v1597 = vunpack.c.l.b16 %v866
        %v1598 = vunpack.c.h.b16 %v866
        %v1599 = vunpack.c.l.b16 %v867
        %v1600 = vunpack.c.h.b16 %v867
        %v1601 = vunpack.c.l.b16 %v868
        %v1602 = vunpack.c.h.b16 %v868
        %v1603 = vunpack.c.l.b16 %v869
        %v1604 = vunpack.c.h.b16 %v869
        %v1605 = vunpack.c.l.b16 %v870
        %v1606 = vunpack.c.h.b16 %v870
        %v1607 = vunpack.c.l.b16 %v871
        %v1608 = vunpack.c.h.b16 %v871
        %v1609 = vunpack.c.l.b16 %v872
        %v1610 = vunpack.c.h.b16 %v872
        %v1611 = vunpack.c.l.b16 %v873
        %v1612 = vunpack.c.h.b16 %v873
        %v1613 = vunpack.c.l.b16 %v874
        %v1614 = vunpack.c.h.b16 %v874
        %v1615 = vunpack.c.l.b16 %v875
        %v1616 = vunpack.c.h.b16 %v875
        %v1617 = vunpack.c.l.b16 %v876
        %v1618 = vunpack.c.h.b16 %v876
        %v1619 = vunpack.c.l.b16 %v877
        %v1620 = vunpack.c.h.b16 %v877
        %v1621 = vunpack.c.l.b16 %v878
        %v1622 = vunpack.c.h.b16 %v878
        %v1623 = vunpack.c.l.b16 %v879
        %v1624 = vunpack.c.h.b16 %v879
        %v1625 = vunpack.c.l.b16 %v880
        %v1626 = vunpack.c.h.b16 %v880
        %v1627 = vunpack.c.l.b16 %v881
        %v1628 = vunpack.c.h.b16 %v881
        %v1629 = vunpack.c.l.b16 %v882
        %v1630 = vunpack.c.h.b16 %v882
        %v1631 = vunpack.c.l.b16 %v883
        %v1632 = vunpack.c.h.b16 %v883
        %v1633 = vunpack.c.l.b16 %v884
        %v1634 = vunpack.c.h.b16 %v884
        %v1635 = vunpack.c.l.b16 %v885
        %v1636 = vunpack.c.h.b16 %v885
        %v1637 = vunpack.c.l.b16 %v886
        %v1638 = vunpack.c.h.b16 %v886
        %v1639 = vunpack.c.l.b16 %v887
        %v1640 = vunpack.c.h.b16 %v887
        %v1641 = vunpack.c.l.b16 %v888
        %v1642 = vunpack.c.h.b16 %v888
        %v1643 = vunpack.c.l.b16 %v889
        %v1644 = vunpack.c.h.b16 %v889
        %v1645 = vunpack.c.l.b16 %v890
        %v1646 = vunpack.c.h.b16 %v890
        %v1647 = vunpack.c.l.b16 %v891
        %v1648 = vunpack.c.h.b16 %v891
        %v1649 = vunpack.c.l.b16 %v892
        %v1650 = vunpack.c.h.b16 %v892
        %v1651 = vunpack.c.l.b16 %v893
        %v1652 = vunpack.c.h.b16 %v893
        %v1653 = vunpack.c.l.b16 %v894
        %v1654 = vunpack.c.h.b16 %v894
        %v1655 = vunpack.c.l.b16 %v895
        %v1656 = vunpack.c.h.b16 %v895
        %v1657 = vunpack.c.l.b16 %v896
        %v1658 = vunpack.c.h.b16 %v896
        %v1659 = vunpack.c.l.b16 %v897
        %v1660 = vunpack.c.h.b16 %v897
        %v1661 = vunpack.c.l.b16 %v898
        %v1662 = vunpack.c.h.b16 %v898
        %v1663 = vunpack.c.l.b16 %v899
        %v1664 = vunpack.c.h.b16 %v899
        %v1665 = vunpack.c.l.b16 %v900
        %v1666 = vunpack.c.h.b16 %v900
        %v1667 = vunpack.c.l.b16 %v901
        %v1668 = vunpack.c.h.b16 %v901
        %v1669 = vunpack.c.l.b16 %v902
        %v1670 = vunpack.c.h.b16 %v902
        %v1671 = vunpack.c.l.b16 %v903
        %v1672 = vunpack.c.h.b16 %v903
        %v1673 = vunpack.c.l.b16 %v904
        %v1674 = vunpack.c.h.b16 %v904
        %v1675 = vunpack.c.l.b16 %v905
        %v1676 = vunpack.c.h.b16 %v905
        %v1677 = vunpack.c.l.b16 %v906
        %v1678 = vunpack.c.h.b16 %v906
        %v1679 = vunpack.c.l.b16 %v907
        %v1680 = vunpack.c.h.b16 %v907
        %v1681 = vunpack.c.l.b16 %v908
        %v1682 = vunpack.c.h.b16 %v908
        %v1683 = vunpack.c.l.b16 %v909
        %v1684 = vunpack.c.h.b16 %v909
        %v1685 = vunpack.c.l.b16 %v910
        %v1686 = vunpack.c.h.b16 %v910
        %v1687 = vunpack.c.l.b16 %v911
        %v1688 = vunpack.c.h.b16 %v911
        %v1689 = vunpack.c.l.b16 %v912
        %v1690 = vunpack.c.h.b16 %v912
        %v1691 = vpack.c.b16 %v1183, %v1179
        %v1692 = vpack.c.b16 %v1184, %v1180
        %v1693 = vpack.c.b16 %v1185, %v1181
        %v1694 = vpack.c.b16 %v1186, %v1182
        %v1695 = vpack.c.b16 %v1191, %v1187
        %v1696 = vpack.c.b16 %v1192, %v1188
        %v1697 = vpack.c.b16 %v1193, %v1189
        %v1698 = vpack.c.b16 %v1194, %v1190
        %v1699 = vpack.c.b16 %v1199, %v1195
        %v1700 = vpack.c.b16 %v1200, %v1196
        %v1701 = vpack.c.b16 %v1201, %v1197
        %v1702 = vpack.c.b16 %v1202, %v1198
        %v1703 = vpack.c.b16 %v1207, %v1203
        %v1704 = vpack.c.b16 %v1208, %v1204
        %v1705 = vpack.c.b16 %v1209, %v1205
        %v1706 = vpack.c.b16 %v1210, %v1206
        %v1707 = vpack.c.b16 %v1215, %v1211
        %v1708 = vpack.c.b16 %v1216, %v1212
        %v1709 = vpack.c.b16 %v1217, %v1213
        %v1710 = vpack.c.b16 %v1218, %v1214
        %v1711 = vpack.c.b16 %v1223, %v1219
        %v1712 = vpack.c.b16 %v1224, %v1220
        %v1713 = vpack.c.b16 %v1225, %v1221
        %v1714 = vpack.c.b16 %v1226, %v1222
        %v1715 = vpack.c.b16 %v1231, %v1227
        %v1716 = vpack.c.b16 %v1232, %v1228
        %v1717 = vpack.c.b16 %v1233, %v1229
        %v1718 = vpack.c.b16 %v1234, %v1230
        %v1719 = vpack.c.b16 %v1239, %v1235
        %v1720 = vpack.c.b16 %v1240, %v1236
        %v1721 = vpack.c.b16 %v1241, %v1237
        %v1722 = vpack.c.b16 %v1242, %v1238
        %v1723 = vpack.c.b16 %v1247, %v1243
        %v1724 = vpack.c.b16 %v1248, %v1244
        %v1725 = vpack.c.b16 %v1249, %v1245
        %v1726 = vpack.c.b16 %v1250, %v1246
        %v1727 = vpack.c.b16 %v1255, %v1251
        %v1728 = vpack.c.b16 %v1256, %v1252
        %v1729 = vpack.c.b16 %v1257, %v1253
        %v1730 = vpack.c.b16 %v1258, %v1254
        %v1731 = vpack.c.b16 %v1263, %v1259
        %v1732 = vpack.c.b16 %v1264, %v1260
        %v1733 = vpack.c.b16 %v1265, %v1261
        %v1734 = vpack.c.b16 %v1266, %v1262
        %v1735 = vpack.c.b16 %v1271, %v1267
        %v1736 = vpack.c.b16 %v1272, %v1268
        %v1737 = vpack.c.b16 %v1273, %v1269
        %v1738 = vpack.c.b16 %v1274, %v1270
        %v1739 = vpack.c.b16 %v1279, %v1275
        %v1740 = vpack.c.b16 %v1280, %v1276
        %v1741 = vpack.c.b16 %v1281, %v1277
        %v1742 = vpack.c.b16 %v1282, %v1278
        %v1743 = vpack.c.b16 %v1287, %v1283
        %v1744 = vpack.c.b16 %v1288, %v1284
        %v1745 = vpack.c.b16 %v1289, %v1285
        %v1746 = vpack.c.b16 %v1290, %v1286
        %v1747 = vpack.c.b16 %v1295, %v1291
        %v1748 = vpack.c.b16 %v1296, %v1292
        %v1749 = vpack.c.b16 %v1297, %v1293
        %v1750 = vpack.c.b16 %v1298, %v1294
        %v1751 = vpack.c.b16 %v1303, %v1299
        %v1752 = vpack.c.b16 %v1304, %v1300
        %v1753 = vpack.c.b16 %v1305, %v1301
        %v1754 = vpack.c.b16 %v1306, %v1302
        %v1755 = vpack.c.b16 %v1311, %v1307
        %v1756 = vpack.c.b16 %v1312, %v1308
        %v1757 = vpack.c.b16 %v1313, %v1309
        %v1758 = vpack.c.b16 %v1314, %v1310
        %v1759 = vpack.c.b16 %v1319, %v1315
        %v1760 = vpack.c.b16 %v1320, %v1316
        %v1761 = vpack.c.b16 %v1321, %v1317
        %v1762 = vpack.c.b16 %v1322, %v1318
        %v1763 = vpack.c.b16 %v1327, %v1323
        %v1764 = vpack.c.b16 %v1328, %v1324
        %v1765 = vpack.c.b16 %v1329, %v1325
        %v1766 = vpack.c.b16 %v1330, %v1326
        %v1767 = vpack.c.b16 %v1335, %v1331
        %v1768 = vpack.c.b16 %v1336, %v1332
        %v1769 = vpack.c.b16 %v1337, %v1333
        %v1770 = vpack.c.b16 %v1338, %v1334
        %v1771 = vpack.c.b16 %v1343, %v1339
        %v1772 = vpack.c.b16 %v1344, %v1340
        %v1773 = vpack.c.b16 %v1345, %v1341
        %v1774 = vpack.c.b16 %v1346, %v1342
        %v1775 = vpack.c.b16 %v1351, %v1347
        %v1776 = vpack.c.b16 %v1352, %v1348
        %v1777 = vpack.c.b16 %v1353, %v1349
        %v1778 = vpack.c.b16 %v1354, %v1350
        %v1779 = vpack.c.b16 %v1359, %v1355
        %v1780 = vpack.c.b16 %v1360, %v1356
        %v1781 = vpack.c.b16 %v1361, %v1357
        %v1782 = vpack.c.b16 %v1362, %v1358
        %v1783 = vpack.c.b16 %v1367, %v1363
        %v1784 = vpack.c.b16 %v1368, %v1364
        %v1785 = vpack.c.b16 %v1369, %v1365
        %v1786 = vpack.c.b16 %v1370, %v1366
        %v1787 = vpack.c.b16 %v1375, %v1371
        %v1788 = vpack.c.b16 %v1376, %v1372
        %v1789 = vpack.c.b16 %v1377, %v1373
        %v1790 = vpack.c.b16 %v1378, %v1374
        %v1791 = vpack.c.b16 %v1383, %v1379
        %v1792 = vpack.c.b16 %v1384, %v1380
        %v1793 = vpack.c.b16 %v1385, %v1381
        %v1794 = vpack.c.b16 %v1386, %v1382
        %v1795 = vpack.c.b16 %v1391, %v1387
        %v1796 = vpack.c.b16 %v1392, %v1388
        %v1797 = vpack.c.b16 %v1393, %v1389
        %v1798 = vpack.c.b16 %v1394, %v1390
        %v1799 = vpack.c.b16 %v1399, %v1395
        %v1800 = vpack.c.b16 %v1400, %v1396
        %v1801 = vpack.c.b16 %v1401, %v1397
        %v1802 = vpack.c.b16 %v1402, %v1398
        %v1803 = vpack.c.b16 %v1407, %v1403
        %v1804 = vpack.c.b16 %v1408, %v1404
        %v1805 = vpack.c.b16 %v1409, %v1405
        %v1806 = vpack.c.b16 %v1410, %v1406
        %v1807 = vpack.c.b16 %v1415, %v1411
        %v1808 = vpack.c.b16 %v1416, %v1412
        %v1809 = vpack.c.b16 %v1417, %v1413
        %v1810 = vpack.c.b16 %v1418, %v1414
        %v1811 = vpack.c.b16 %v1423, %v1419
        %v1812 = vpack.c.b16 %v1424, %v1420
        %v1813 = vpack.c.b16 %v1425, %v1421
        %v1814 = vpack.c.b16 %v1426, %v1422
        %v1815 = vpack.c.b16 %v1431, %v1427
        %v1816 = vpack.c.b16 %v1432, %v1428
        %v1817 = vpack.c.b16 %v1433, %v1429
        %v1818 = vpack.c.b16 %v1434, %v1430
        %v1819 = vpack.c.b16 %v1439, %v1435
        %v1820 = vpack.c.b16 %v1440, %v1436
        %v1821 = vpack.c.b16 %v1441, %v1437
        %v1822 = vpack.c.b16 %v1442, %v1438
        %v1823 = vpack.c.b16 %v1447, %v1443
        %v1824 = vpack.c.b16 %v1448, %v1444
        %v1825 = vpack.c.b16 %v1449, %v1445
        %v1826 = vpack.c.b16 %v1450, %v1446
        %v1827 = vpack.c.b16 %v1455, %v1451
        %v1828 = vpack.c.b16 %v1456, %v1452
        %v1829 = vpack.c.b16 %v1457, %v1453
        %v1830 = vpack.c.b16 %v1458, %v1454
        %v1831 = vpack.c.b16 %v1463, %v1459
        %v1832 = vpack.c.b16 %v1464, %v1460
        %v1833 = vpack.c.b16 %v1465, %v1461
        %v1834 = vpack.c.b16 %v1466, %v1462
        %v1835 = vpack.c.b16 %v1471, %v1467
        %v1836 = vpack.c.b16 %v1472, %v1468
        %v1837 = vpack.c.b16 %v1473, %v1469
        %v1838 = vpack.c.b16 %v1474, %v1470
        %v1839 = vpack.c.b16 %v1479, %v1475
        %v1840 = vpack.c.b16 %v1480, %v1476
        %v1841 = vpack.c.b16 %v1481, %v1477
        %v1842 = vpack.c.b16 %v1482, %v1478
        %v1843 = vpack.c.b16 %v1487, %v1483
        %v1844 = vpack.c.b16 %v1488, %v1484
        %v1845 = vpack.c.b16 %v1489, %v1485
        %v1846 = vpack.c.b16 %v1490, %v1486
        %v1847 = vpack.c.b16 %v1495, %v1491
        %v1848 = vpack.c.b16 %v1496, %v1492
        %v1849 = vpack.c.b16 %v1497, %v1493
        %v1850 = vpack.c.b16 %v1498, %v1494
        %v1851 = vpack.c.b16 %v1503, %v1499
        %v1852 = vpack.c.b16 %v1504, %v1500
        %v1853 = vpack.c.b16 %v1505, %v1501
        %v1854 = vpack.c.b16 %v1506, %v1502
        %v1855 = vpack.c.b16 %v1511, %v1507
        %v1856 = vpack.c.b16 %v1512, %v1508
        %v1857 = vpack.c.b16 %v1513, %v1509
        %v1858 = vpack.c.b16 %v1514, %v1510
        %v1859 = vpack.c.b16 %v1519, %v1515
        %v1860 = vpack.c.b16 %v1520, %v1516
        %v1861 = vpack.c.b16 %v1521, %v1517
        %v1862 = vpack.c.b16 %v1522, %v1518
        %v1863 = vpack.c.b16 %v1527, %v1523
        %v1864 = vpack.c.b16 %v1528, %v1524
        %v1865 = vpack.c.b16 %v1529, %v1525
        %v1866 = vpack.c.b16 %v1530, %v1526
        %v1867 = vpack.c.b16 %v1535, %v1531
        %v1868 = vpack.c.b16 %v1536, %v1532
        %v1869 = vpack.c.b16 %v1537, %v1533
        %v1870 = vpack.c.b16 %v1538, %v1534
        %v1871 = vpack.c.b16 %v1543, %v1539
        %v1872 = vpack.c.b16 %v1544, %v1540
        %v1873 = vpack.c.b16 %v1545, %v1541
        %v1874 = vpack.c.b16 %v1546, %v1542
        %v1875 = vpack.c.b16 %v1551, %v1547
        %v1876 = vpack.c.b16 %v1552, %v1548
        %v1877 = vpack.c.b16 %v1553, %v1549
        %v1878 = vpack.c.b16 %v1554, %v1550
        %v1879 = vpack.c.b16 %v1559, %v1555
        %v1880 = vpack.c.b16 %v1560, %v1556
        %v1881 = vpack.c.b16 %v1561, %v1557
        %v1882 = vpack.c.b16 %v1562, %v1558
        %v1883 = vpack.c.b16 %v1567, %v1563
        %v1884 = vpack.c.b16 %v1568, %v1564
        %v1885 = vpack.c.b16 %v1569, %v1565
        %v1886 = vpack.c.b16 %v1570, %v1566
        %v1887 = vpack.c.b16 %v1575, %v1571
        %v1888 = vpack.c.b16 %v1576, %v1572
        %v1889 = vpack.c.b16 %v1577, %v1573
        %v1890 = vpack.c.b16 %v1578, %v1574
        %v1891 = vpack.c.b16 %v1583, %v1579
        %v1892 = vpack.c.b16 %v1584, %v1580
        %v1893 = vpack.c.b16 %v1585, %v1581
        %v1894 = vpack.c.b16 %v1586, %v1582
        %v1895 = vpack.c.b16 %v1591, %v1587
        %v1896 = vpack.c.b16 %v1592, %v1588
        %v1897 = vpack.c.b16 %v1593, %v1589
        %v1898 = vpack.c.b16 %v1594, %v1590
        %v1899 = vpack.c.b16 %v1599, %v1595
        %v1900 = vpack.c.b16 %v1600, %v1596
        %v1901 = vpack.c.b16 %v1601, %v1597
        %v1902 = vpack.c.b16 %v1602, %v1598
        %v1903 = vpack.c.b16 %v1607, %v1603
        %v1904 = vpack.c.b16 %v1608, %v1604
        %v1905 = vpack.c.b16 %v1609, %v1605
        %v1906 = vpack.c.b16 %v1610, %v1606
        %v1907 = vpack.c.b16 %v1615, %v1611
        %v1908 = vpack.c.b16 %v1616, %v1612
        %v1909 = vpack.c.b16 %v1617, %v1613
        %v1910 = vpack.c.b16 %v1618, %v1614
        %v1911 = vpack.c.b16 %v1623, %v1619
        %v1912 = vpack.c.b16 %v1624, %v1620
        %v1913 = vpack.c.b16 %v1625, %v1621
        %v1914 = vpack.c.b16 %v1626, %v1622
        %v1915 = vpack.c.b16 %v1631, %v1627
        %v1916 = vpack.c.b16 %v1632, %v1628
        %v1917 = vpack.c.b16 %v1633, %v1629
        %v1918 = vpack.c.b16 %v1634, %v1630
        %v1919 = vpack.c.b16 %v1639, %v1635
        %v1920 = vpack.c.b16 %v1640, %v1636
        %v1921 = vpack.c.b16 %v1641, %v1637
        %v1922 = vpack.c.b16 %v1642, %v1638
        %v1923 = vpack.c.b16 %v1647, %v1643
        %v1924 = vpack.c.b16 %v1648, %v1644
        %v1925 = vpack.c.b16 %v1649, %v1645
        %v1926 = vpack.c.b16 %v1650, %v1646
        %v1927 = vpack.c.b16 %v1655, %v1651
        %v1928 = vpack.c.b16 %v1656, %v1652
        %v1929 = vpack.c.b16 %v1657, %v1653
        %v1930 = vpack.c.b16 %v1658, %v1654
        %v1931 = vpack.c.b16 %v1663, %v1659
        %v1932 = vpack.c.b16 %v1664, %v1660
        %v1933 = vpack.c.b16 %v1665, %v1661
        %v1934 = vpack.c.b16 %v1666, %v1662
        %v1935 = vpack.c.b16 %v1671, %v1667
        %v1936 = vpack.c.b16 %v1672, %v1668
        %v1937 = vpack.c.b16 %v1673, %v1669
        %v1938 = vpack.c.b16 %v1674, %v1670
        %v1939 = vpack.c.b16 %v1679, %v1675
        %v1940 = vpack.c.b16 %v1680, %v1676
        %v1941 = vpack.c.b16 %v1681, %v1677
        %v1942 = vpack.c.b16 %v1682, %v1678
        %v1943 = vpack.c.b16 %v1687, %v1683
        %v1944 = vpack.c.b16 %v1688, %v1684
        %v1945 = vpack.c.b16 %v1689, %v1685
        %v1946 = vpack.c.b16 %v1690, %v1686
        %2203 = vmatpush.bf16.msra.mxu0 %v1719
        %2204 = vmatpush.bf16.msra.mxu0 %v1715
        %2205 = vmatpush.bf16.msra.mxu0 %v1711
        %2206 = vmatpush.bf16.msra.mxu0 %v1707
        %2207 = vmatpush.bf16.msra.mxu0 %v1703
        %2208 = vmatpush.bf16.msra.mxu0 %v1699
        %2209 = vmatpush.bf16.msra.mxu0 %v1695
        %2210 = vmatpush.bf16.msra.mxu0 %v1691
        %2211 = vmatmul.bf16.gmra.mxu0 %v649
        %v2212 = vpop.f32.mrf.mxu0
        %v2213 = vadd.f32 %v915, %v2212
        %v2214 = vpop.f32.mrf.mxu0
        %2215 = vdwg.mxu0
        %2216 = vmatpush.bf16.msra.mxu0 %v1751
        %2217 = vmatpush.bf16.msra.mxu0 %v1747
        %2218 = vmatpush.bf16.msra.mxu0 %v1743
        %2219 = vmatpush.bf16.msra.mxu0 %v1739
        %2220 = vmatpush.bf16.msra.mxu0 %v1735
        %2221 = vmatpush.bf16.msra.mxu0 %v1731
        %2222 = vmatpush.bf16.msra.mxu0 %v1727
        %2223 = vmatpush.bf16.msra.mxu0 %v1723
        %2224 = vmatmul.bf16.gmra.mxu0 %v650
        %v2225 = vpop.f32.mrf.mxu0
        %v2226 = vadd.f32 %v2213, %v2225
        %v2227 = vpop.f32.mrf.mxu0
        %2228 = vdwg.mxu0
        %2229 = vmatpush.bf16.msra.mxu0 %v1783
        %2230 = vmatpush.bf16.msra.mxu0 %v1779
        %2231 = vmatpush.bf16.msra.mxu0 %v1775
        %2232 = vmatpush.bf16.msra.mxu0 %v1771
        %2233 = vmatpush.bf16.msra.mxu0 %v1767
        %2234 = vmatpush.bf16.msra.mxu0 %v1763
        %2235 = vmatpush.bf16.msra.mxu0 %v1759
        %2236 = vmatpush.bf16.msra.mxu0 %v1755
        %2237 = vmatmul.bf16.gmra.mxu0 %v651
        %v2238 = vpop.f32.mrf.mxu0
        %v2239 = vadd.f32 %v2226, %v2238
        %v2240 = vpop.f32.mrf.mxu0
        %2241 = vdwg.mxu0
        %2242 = vmatpush.bf16.msra.mxu0 %v1815
        %2243 = vmatpush.bf16.msra.mxu0 %v1811
        %2244 = vmatpush.bf16.msra.mxu0 %v1807
        %2245 = vmatpush.bf16.msra.mxu0 %v1803
        %2246 = vmatpush.bf16.msra.mxu0 %v1799
        %2247 = vmatpush.bf16.msra.mxu0 %v1795
        %2248 = vmatpush.bf16.msra.mxu0 %v1791
        %2249 = vmatpush.bf16.msra.mxu0 %v1787
        %2250 = vmatmul.bf16.gmra.mxu0 %v652
        %v2251 = vpop.f32.mrf.mxu0
        %v2252 = vadd.f32 %v2239, %v2251
        %v2253 = vpop.f32.mrf.mxu0
        %2254 = vdwg.mxu0
        %2255 = vmatpush.bf16.msra.mxu0 %v1847
        %2256 = vmatpush.bf16.msra.mxu0 %v1843
        %2257 = vmatpush.bf16.msra.mxu0 %v1839
        %2258 = vmatpush.bf16.msra.mxu0 %v1835
        %2259 = vmatpush.bf16.msra.mxu0 %v1831
        %2260 = vmatpush.bf16.msra.mxu0 %v1827
        %2261 = vmatpush.bf16.msra.mxu0 %v1823
        %2262 = vmatpush.bf16.msra.mxu0 %v1819
        %2263 = vmatmul.bf16.gmra.mxu0 %v653
        %v2264 = vpop.f32.mrf.mxu0
        %v2265 = vadd.f32 %v2252, %v2264
        %v2266 = vpop.f32.mrf.mxu0
        %2267 = vdwg.mxu0
        %2268 = vmatpush.bf16.msra.mxu0 %v1879
        %2269 = vmatpush.bf16.msra.mxu0 %v1875
        %2270 = vmatpush.bf16.msra.mxu0 %v1871
        %2271 = vmatpush.bf16.msra.mxu0 %v1867
        %2272 = vmatpush.bf16.msra.mxu0 %v1863
        %2273 = vmatpush.bf16.msra.mxu0 %v1859
        %2274 = vmatpush.bf16.msra.mxu0 %v1855
        %2275 = vmatpush.bf16.msra.mxu0 %v1851
        %2276 = vmatmul.bf16.gmra.mxu0 %v654
        %v2277 = vpop.f32.mrf.mxu0
        %v2278 = vadd.f32 %v2265, %v2277
        %v2279 = vpop.f32.mrf.mxu0
        %2280 = vdwg.mxu0
        %2281 = vmatpush.bf16.msra.mxu0 %v1911
        %2282 = vmatpush.bf16.msra.mxu0 %v1907
        %2283 = vmatpush.bf16.msra.mxu0 %v1903
        %2284 = vmatpush.bf16.msra.mxu0 %v1899
        %2285 = vmatpush.bf16.msra.mxu0 %v1895
        %2286 = vmatpush.bf16.msra.mxu0 %v1891
        %2287 = vmatpush.bf16.msra.mxu0 %v1887
        %2288 = vmatpush.bf16.msra.mxu0 %v1883
        %2289 = vmatmul.bf16.gmra.mxu0 %v655
        %v2290 = vpop.f32.mrf.mxu0
        %v2291 = vadd.f32 %v2278, %v2290
        %v2292 = vpop.f32.mrf.mxu0
        %2293 = vdwg.mxu0
        %2294 = vmatpush.bf16.msra.mxu0 %v1943
        %2295 = vmatpush.bf16.msra.mxu0 %v1939
        %2296 = vmatpush.bf16.msra.mxu0 %v1935
        %2297 = vmatpush.bf16.msra.mxu0 %v1931
        %2298 = vmatpush.bf16.msra.mxu0 %v1927
        %2299 = vmatpush.bf16.msra.mxu0 %v1923
        %2300 = vmatpush.bf16.msra.mxu0 %v1919
        %2301 = vmatpush.bf16.msra.mxu0 %v1915
        %2302 = vmatmul.bf16.gmra.mxu0 %v656
        %v2303 = vpop.f32.mrf.mxu0
        %v2304 = vadd.f32 %v2291, %v2303
        %v2305 = vpop.f32.mrf.mxu0
        %2306 = vdwg.mxu0
        %2307 = vmatpush.bf16.msra.mxu0 %v1720
        %2308 = vmatpush.bf16.msra.mxu0 %v1716
        %2309 = vmatpush.bf16.msra.mxu0 %v1712
        %2310 = vmatpush.bf16.msra.mxu0 %v1708
        %2311 = vmatpush.bf16.msra.mxu0 %v1704
        %2312 = vmatpush.bf16.msra.mxu0 %v1700
        %2313 = vmatpush.bf16.msra.mxu0 %v1696
        %2314 = vmatpush.bf16.msra.mxu0 %v1692
        %2315 = vmatmul.bf16.gmra.mxu0 %v649
        %v2316 = vpop.f32.mrf.mxu0
        %v2317 = vadd.f32 %v916, %v2316
        %v2318 = vpop.f32.mrf.mxu0
        %2319 = vdwg.mxu0
        %2320 = vmatpush.bf16.msra.mxu0 %v1752
        %2321 = vmatpush.bf16.msra.mxu0 %v1748
        %2322 = vmatpush.bf16.msra.mxu0 %v1744
        %2323 = vmatpush.bf16.msra.mxu0 %v1740
        %2324 = vmatpush.bf16.msra.mxu0 %v1736
        %2325 = vmatpush.bf16.msra.mxu0 %v1732
        %2326 = vmatpush.bf16.msra.mxu0 %v1728
        %2327 = vmatpush.bf16.msra.mxu0 %v1724
        %2328 = vmatmul.bf16.gmra.mxu0 %v650
        %v2329 = vpop.f32.mrf.mxu0
        %v2330 = vadd.f32 %v2317, %v2329
        %v2331 = vpop.f32.mrf.mxu0
        %2332 = vdwg.mxu0
        %2333 = vmatpush.bf16.msra.mxu0 %v1784
        %2334 = vmatpush.bf16.msra.mxu0 %v1780
        %2335 = vmatpush.bf16.msra.mxu0 %v1776
        %2336 = vmatpush.bf16.msra.mxu0 %v1772
        %2337 = vmatpush.bf16.msra.mxu0 %v1768
        %2338 = vmatpush.bf16.msra.mxu0 %v1764
        %2339 = vmatpush.bf16.msra.mxu0 %v1760
        %2340 = vmatpush.bf16.msra.mxu0 %v1756
        %2341 = vmatmul.bf16.gmra.mxu0 %v651
        %v2342 = vpop.f32.mrf.mxu0
        %v2343 = vadd.f32 %v2330, %v2342
        %v2344 = vpop.f32.mrf.mxu0
        %2345 = vdwg.mxu0
        %2346 = vmatpush.bf16.msra.mxu0 %v1816
        %2347 = vmatpush.bf16.msra.mxu0 %v1812
        %2348 = vmatpush.bf16.msra.mxu0 %v1808
        %2349 = vmatpush.bf16.msra.mxu0 %v1804
        %2350 = vmatpush.bf16.msra.mxu0 %v1800
        %2351 = vmatpush.bf16.msra.mxu0 %v1796
        %2352 = vmatpush.bf16.msra.mxu0 %v1792
        %2353 = vmatpush.bf16.msra.mxu0 %v1788
        %2354 = vmatmul.bf16.gmra.mxu0 %v652
        %v2355 = vpop.f32.mrf.mxu0
        %v2356 = vadd.f32 %v2343, %v2355
        %v2357 = vpop.f32.mrf.mxu0
        %2358 = vdwg.mxu0
        %2359 = vmatpush.bf16.msra.mxu0 %v1848
        %2360 = vmatpush.bf16.msra.mxu0 %v1844
        %2361 = vmatpush.bf16.msra.mxu0 %v1840
        %2362 = vmatpush.bf16.msra.mxu0 %v1836
        %2363 = vmatpush.bf16.msra.mxu0 %v1832
        %2364 = vmatpush.bf16.msra.mxu0 %v1828
        %2365 = vmatpush.bf16.msra.mxu0 %v1824
        %2366 = vmatpush.bf16.msra.mxu0 %v1820
        %2367 = vmatmul.bf16.gmra.mxu0 %v653
        %v2368 = vpop.f32.mrf.mxu0
        %v2369 = vadd.f32 %v2356, %v2368
        %v2370 = vpop.f32.mrf.mxu0
        %2371 = vdwg.mxu0
        %2372 = vmatpush.bf16.msra.mxu0 %v1880
        %2373 = vmatpush.bf16.msra.mxu0 %v1876
        %2374 = vmatpush.bf16.msra.mxu0 %v1872
        %2375 = vmatpush.bf16.msra.mxu0 %v1868
        %2376 = vmatpush.bf16.msra.mxu0 %v1864
        %2377 = vmatpush.bf16.msra.mxu0 %v1860
        %2378 = vmatpush.bf16.msra.mxu0 %v1856
        %2379 = vmatpush.bf16.msra.mxu0 %v1852
        %2380 = vmatmul.bf16.gmra.mxu0 %v654
        %v2381 = vpop.f32.mrf.mxu0
        %v2382 = vadd.f32 %v2369, %v2381
        %v2383 = vpop.f32.mrf.mxu0
        %2384 = vdwg.mxu0
        %2385 = vmatpush.bf16.msra.mxu0 %v1912
        %2386 = vmatpush.bf16.msra.mxu0 %v1908
        %2387 = vmatpush.bf16.msra.mxu0 %v1904
        %2388 = vmatpush.bf16.msra.mxu0 %v1900
        %2389 = vmatpush.bf16.msra.mxu0 %v1896
        %2390 = vmatpush.bf16.msra.mxu0 %v1892
        %2391 = vmatpush.bf16.msra.mxu0 %v1888
        %2392 = vmatpush.bf16.msra.mxu0 %v1884
        %2393 = vmatmul.bf16.gmra.mxu0 %v655
        %v2394 = vpop.f32.mrf.mxu0
        %v2395 = vadd.f32 %v2382, %v2394
        %v2396 = vpop.f32.mrf.mxu0
        %2397 = vdwg.mxu0
        %2398 = vmatpush.bf16.msra.mxu0 %v1944
        %2399 = vmatpush.bf16.msra.mxu0 %v1940
        %2400 = vmatpush.bf16.msra.mxu0 %v1936
        %2401 = vmatpush.bf16.msra.mxu0 %v1932
        %2402 = vmatpush.bf16.msra.mxu0 %v1928
        %2403 = vmatpush.bf16.msra.mxu0 %v1924
        %2404 = vmatpush.bf16.msra.mxu0 %v1920
        %2405 = vmatpush.bf16.msra.mxu0 %v1916
        %2406 = vmatmul.bf16.gmra.mxu0 %v656
        %v2407 = vpop.f32.mrf.mxu0
        %v2408 = vadd.f32 %v2395, %v2407
        %v2409 = vpop.f32.mrf.mxu0
        %2410 = vdwg.mxu0
        %2411 = vmatpush.bf16.msra.mxu0 %v1721
        %2412 = vmatpush.bf16.msra.mxu0 %v1717
        %2413 = vmatpush.bf16.msra.mxu0 %v1713
        %2414 = vmatpush.bf16.msra.mxu0 %v1709
        %2415 = vmatpush.bf16.msra.mxu0 %v1705
        %2416 = vmatpush.bf16.msra.mxu0 %v1701
        %2417 = vmatpush.bf16.msra.mxu0 %v1697
        %2418 = vmatpush.bf16.msra.mxu0 %v1693
        %2419 = vmatmul.bf16.gmra.mxu0 %v649
        %v2420 = vpop.f32.mrf.mxu0
        %v2421 = vadd.f32 %v917, %v2420
        %v2422 = vpop.f32.mrf.mxu0
        %2423 = vdwg.mxu0
        %2424 = vmatpush.bf16.msra.mxu0 %v1753
        %2425 = vmatpush.bf16.msra.mxu0 %v1749
        %2426 = vmatpush.bf16.msra.mxu0 %v1745
        %2427 = vmatpush.bf16.msra.mxu0 %v1741
        %2428 = vmatpush.bf16.msra.mxu0 %v1737
        %2429 = vmatpush.bf16.msra.mxu0 %v1733
        %2430 = vmatpush.bf16.msra.mxu0 %v1729
        %2431 = vmatpush.bf16.msra.mxu0 %v1725
        %2432 = vmatmul.bf16.gmra.mxu0 %v650
        %v2433 = vpop.f32.mrf.mxu0
        %v2434 = vadd.f32 %v2421, %v2433
        %v2435 = vpop.f32.mrf.mxu0
        %2436 = vdwg.mxu0
        %2437 = vmatpush.bf16.msra.mxu0 %v1785
        %2438 = vmatpush.bf16.msra.mxu0 %v1781
        %2439 = vmatpush.bf16.msra.mxu0 %v1777
        %2440 = vmatpush.bf16.msra.mxu0 %v1773
        %2441 = vmatpush.bf16.msra.mxu0 %v1769
        %2442 = vmatpush.bf16.msra.mxu0 %v1765
        %2443 = vmatpush.bf16.msra.mxu0 %v1761
        %2444 = vmatpush.bf16.msra.mxu0 %v1757
        %2445 = vmatmul.bf16.gmra.mxu0 %v651
        %v2446 = vpop.f32.mrf.mxu0
        %v2447 = vadd.f32 %v2434, %v2446
        %v2448 = vpop.f32.mrf.mxu0
        %2449 = vdwg.mxu0
        %2450 = vmatpush.bf16.msra.mxu0 %v1817
        %2451 = vmatpush.bf16.msra.mxu0 %v1813
        %2452 = vmatpush.bf16.msra.mxu0 %v1809
        %2453 = vmatpush.bf16.msra.mxu0 %v1805
        %2454 = vmatpush.bf16.msra.mxu0 %v1801
        %2455 = vmatpush.bf16.msra.mxu0 %v1797
        %2456 = vmatpush.bf16.msra.mxu0 %v1793
        %2457 = vmatpush.bf16.msra.mxu0 %v1789
        %2458 = vmatmul.bf16.gmra.mxu0 %v652
        %v2459 = vpop.f32.mrf.mxu0
        %v2460 = vadd.f32 %v2447, %v2459
        %v2461 = vpop.f32.mrf.mxu0
        %2462 = vdwg.mxu0
        %2463 = vmatpush.bf16.msra.mxu0 %v1849
        %2464 = vmatpush.bf16.msra.mxu0 %v1845
        %2465 = vmatpush.bf16.msra.mxu0 %v1841
        %2466 = vmatpush.bf16.msra.mxu0 %v1837
        %2467 = vmatpush.bf16.msra.mxu0 %v1833
        %2468 = vmatpush.bf16.msra.mxu0 %v1829
        %2469 = vmatpush.bf16.msra.mxu0 %v1825
        %2470 = vmatpush.bf16.msra.mxu0 %v1821
        %2471 = vmatmul.bf16.gmra.mxu0 %v653
        %v2472 = vpop.f32.mrf.mxu0
        %v2473 = vadd.f32 %v2460, %v2472
        %v2474 = vpop.f32.mrf.mxu0
        %2475 = vdwg.mxu0
        %2476 = vmatpush.bf16.msra.mxu0 %v1881
        %2477 = vmatpush.bf16.msra.mxu0 %v1877
        %2478 = vmatpush.bf16.msra.mxu0 %v1873
        %2479 = vmatpush.bf16.msra.mxu0 %v1869
        %2480 = vmatpush.bf16.msra.mxu0 %v1865
        %2481 = vmatpush.bf16.msra.mxu0 %v1861
        %2482 = vmatpush.bf16.msra.mxu0 %v1857
        %2483 = vmatpush.bf16.msra.mxu0 %v1853
        %2484 = vmatmul.bf16.gmra.mxu0 %v654
        %v2485 = vpop.f32.mrf.mxu0
        %v2486 = vadd.f32 %v2473, %v2485
        %v2487 = vpop.f32.mrf.mxu0
        %2488 = vdwg.mxu0
        %2489 = vmatpush.bf16.msra.mxu0 %v1913
        %2490 = vmatpush.bf16.msra.mxu0 %v1909
        %2491 = vmatpush.bf16.msra.mxu0 %v1905
        %2492 = vmatpush.bf16.msra.mxu0 %v1901
        %2493 = vmatpush.bf16.msra.mxu0 %v1897
        %2494 = vmatpush.bf16.msra.mxu0 %v1893
        %2495 = vmatpush.bf16.msra.mxu0 %v1889
        %2496 = vmatpush.bf16.msra.mxu0 %v1885
        %2497 = vmatmul.bf16.gmra.mxu0 %v655
        %v2498 = vpop.f32.mrf.mxu0
        %v2499 = vadd.f32 %v2486, %v2498
        %v2500 = vpop.f32.mrf.mxu0
        %2501 = vdwg.mxu0
        %2502 = vmatpush.bf16.msra.mxu0 %v1945
        %2503 = vmatpush.bf16.msra.mxu0 %v1941
        %2504 = vmatpush.bf16.msra.mxu0 %v1937
        %2505 = vmatpush.bf16.msra.mxu0 %v1933
        %2506 = vmatpush.bf16.msra.mxu0 %v1929
        %2507 = vmatpush.bf16.msra.mxu0 %v1925
        %2508 = vmatpush.bf16.msra.mxu0 %v1921
        %2509 = vmatpush.bf16.msra.mxu0 %v1917
        %2510 = vmatmul.bf16.gmra.mxu0 %v656
        %v2511 = vpop.f32.mrf.mxu0
        %v2512 = vadd.f32 %v2499, %v2511
        %v2513 = vpop.f32.mrf.mxu0
        %2514 = vdwg.mxu0
        %2515 = vmatpush.bf16.msra.mxu0 %v1722
        %2516 = vmatpush.bf16.msra.mxu0 %v1718
        %2517 = vmatpush.bf16.msra.mxu0 %v1714
        %2518 = vmatpush.bf16.msra.mxu0 %v1710
        %2519 = vmatpush.bf16.msra.mxu0 %v1706
        %2520 = vmatpush.bf16.msra.mxu0 %v1702
        %2521 = vmatpush.bf16.msra.mxu0 %v1698
        %2522 = vmatpush.bf16.msra.mxu0 %v1694
        %2523 = vmatmul.bf16.gmra.mxu0 %v649
        %v2524 = vpop.f32.mrf.mxu0
        %v2525 = vadd.f32 %v918, %v2524
        %v2526 = vpop.f32.mrf.mxu0
        %2527 = vdwg.mxu0
        %2528 = vmatpush.bf16.msra.mxu0 %v1754
        %2529 = vmatpush.bf16.msra.mxu0 %v1750
        %2530 = vmatpush.bf16.msra.mxu0 %v1746
        %2531 = vmatpush.bf16.msra.mxu0 %v1742
        %2532 = vmatpush.bf16.msra.mxu0 %v1738
        %2533 = vmatpush.bf16.msra.mxu0 %v1734
        %2534 = vmatpush.bf16.msra.mxu0 %v1730
        %2535 = vmatpush.bf16.msra.mxu0 %v1726
        %2536 = vmatmul.bf16.gmra.mxu0 %v650
        %v2537 = vpop.f32.mrf.mxu0
        %v2538 = vadd.f32 %v2525, %v2537
        %v2539 = vpop.f32.mrf.mxu0
        %2540 = vdwg.mxu0
        %2541 = vmatpush.bf16.msra.mxu0 %v1786
        %2542 = vmatpush.bf16.msra.mxu0 %v1782
        %2543 = vmatpush.bf16.msra.mxu0 %v1778
        %2544 = vmatpush.bf16.msra.mxu0 %v1774
        %2545 = vmatpush.bf16.msra.mxu0 %v1770
        %2546 = vmatpush.bf16.msra.mxu0 %v1766
        %2547 = vmatpush.bf16.msra.mxu0 %v1762
        %2548 = vmatpush.bf16.msra.mxu0 %v1758
        %2549 = vmatmul.bf16.gmra.mxu0 %v651
        %v2550 = vpop.f32.mrf.mxu0
        %v2551 = vadd.f32 %v2538, %v2550
        %v2552 = vpop.f32.mrf.mxu0
        %2553 = vdwg.mxu0
        %2554 = vmatpush.bf16.msra.mxu0 %v1818
        %2555 = vmatpush.bf16.msra.mxu0 %v1814
        %2556 = vmatpush.bf16.msra.mxu0 %v1810
        %2557 = vmatpush.bf16.msra.mxu0 %v1806
        %2558 = vmatpush.bf16.msra.mxu0 %v1802
        %2559 = vmatpush.bf16.msra.mxu0 %v1798
        %2560 = vmatpush.bf16.msra.mxu0 %v1794
        %2561 = vmatpush.bf16.msra.mxu0 %v1790
        %2562 = vmatmul.bf16.gmra.mxu0 %v652
        %v2563 = vpop.f32.mrf.mxu0
        %v2564 = vadd.f32 %v2551, %v2563
        %v2565 = vpop.f32.mrf.mxu0
        %2566 = vdwg.mxu0
        %2567 = vmatpush.bf16.msra.mxu0 %v1850
        %2568 = vmatpush.bf16.msra.mxu0 %v1846
        %2569 = vmatpush.bf16.msra.mxu0 %v1842
        %2570 = vmatpush.bf16.msra.mxu0 %v1838
        %2571 = vmatpush.bf16.msra.mxu0 %v1834
        %2572 = vmatpush.bf16.msra.mxu0 %v1830
        %2573 = vmatpush.bf16.msra.mxu0 %v1826
        %2574 = vmatpush.bf16.msra.mxu0 %v1822
        %2575 = vmatmul.bf16.gmra.mxu0 %v653
        %v2576 = vpop.f32.mrf.mxu0
        %v2577 = vadd.f32 %v2564, %v2576
        %v2578 = vpop.f32.mrf.mxu0
        %2579 = vdwg.mxu0
        %2580 = vmatpush.bf16.msra.mxu0 %v1882
        %2581 = vmatpush.bf16.msra.mxu0 %v1878
        %2582 = vmatpush.bf16.msra.mxu0 %v1874
        %2583 = vmatpush.bf16.msra.mxu0 %v1870
        %2584 = vmatpush.bf16.msra.mxu0 %v1866
        %2585 = vmatpush.bf16.msra.mxu0 %v1862
        %2586 = vmatpush.bf16.msra.mxu0 %v1858
        %2587 = vmatpush.bf16.msra.mxu0 %v1854
        %2588 = vmatmul.bf16.gmra.mxu0 %v654
        %v2589 = vpop.f32.mrf.mxu0
        %v2590 = vadd.f32 %v2577, %v2589
        %v2591 = vpop.f32.mrf.mxu0
        %2592 = vdwg.mxu0
        %2593 = vmatpush.bf16.msra.mxu0 %v1914
        %2594 = vmatpush.bf16.msra.mxu0 %v1910
        %2595 = vmatpush.bf16.msra.mxu0 %v1906
        %2596 = vmatpush.bf16.msra.mxu0 %v1902
        %2597 = vmatpush.bf16.msra.mxu0 %v1898
        %2598 = vmatpush.bf16.msra.mxu0 %v1894
        %2599 = vmatpush.bf16.msra.mxu0 %v1890
        %2600 = vmatpush.bf16.msra.mxu0 %v1886
        %2601 = vmatmul.bf16.gmra.mxu0 %v655
        %v2602 = vpop.f32.mrf.mxu0
        %v2603 = vadd.f32 %v2590, %v2602
        %v2604 = vpop.f32.mrf.mxu0
        %2605 = vdwg.mxu0
        %2606 = vmatpush.bf16.msra.mxu0 %v1946
        %2607 = vmatpush.bf16.msra.mxu0 %v1942
        %2608 = vmatpush.bf16.msra.mxu0 %v1938
        %2609 = vmatpush.bf16.msra.mxu0 %v1934
        %2610 = vmatpush.bf16.msra.mxu0 %v1930
        %2611 = vmatpush.bf16.msra.mxu0 %v1926
        %2612 = vmatpush.bf16.msra.mxu0 %v1922
        %2613 = vmatpush.bf16.msra.mxu0 %v1918
        %2614 = vmatmul.bf16.gmra.mxu0 %v656
        %v2615 = vpop.f32.mrf.mxu0
        %v2616 = vadd.f32 %v2603, %v2615
        %v2617 = vpop.f32.mrf.mxu0
        %2618 = vdwg.mxu0
        %v2619 = vmax.f32 %v2304, 0.0
        %v2620 = vmax.f32 %v2408, 0.0
        %v2621 = vmax.f32 %v2512, 0.0
        %v2622 = vmax.f32 %v2616, 0.0
        %v2623 = vpack.c.bf16 %v2619, %v2619
        %v2624 = vpack.c.bf16 %v2620, %v2620
        %v2625 = vpack.c.bf16 %v2621, %v2621
        %v2626 = vpack.c.bf16 %v2622, %v2622
        %v2627 = vld [vmem:[#allocation7] sm:$0xff]
        %v2628 = vld [vmem:[#allocation7 + $0x8] sm:$0xff]
        %v2629 = vld [vmem:[#allocation7 + $0x10] sm:$0xff]
        %v2630 = vld [vmem:[#allocation7 + $0x18] sm:$0xff]
        %v2631 = vld [vmem:[#allocation7 + $0x20] sm:$0xff]
        %v2632 = vld [vmem:[#allocation7 + $0x28] sm:$0xff]
        %v2633 = vld [vmem:[#allocation7 + $0x30] sm:$0xff]
        %v2634 = vld [vmem:[#allocation7 + $0x38] sm:$0xff]
        %v2635 = vld [vmem:[#allocation7 + $0x40] sm:$0xff]
        %v2636 = vld [vmem:[#allocation7 + $0x48] sm:$0xff]
        %v2637 = vld [vmem:[#allocation7 + $0x50] sm:$0xff]
        %v2638 = vld [vmem:[#allocation7 + $0x58] sm:$0xff]
        %v2639 = vld [vmem:[#allocation7 + $0x60] sm:$0xff]
        %v2640 = vld [vmem:[#allocation7 + $0x68] sm:$0xff]
        %v2641 = vld [vmem:[#allocation7 + $0x70] sm:$0xff]
        %v2642 = vld [vmem:[#allocation7 + $0x78] sm:$0xff]
        %v2643 = vld [vmem:[#allocation7 + $0x80] sm:$0xff]
        %v2644 = vld [vmem:[#allocation7 + $0x88] sm:$0xff]
        %v2645 = vld [vmem:[#allocation7 + $0x90] sm:$0xff]
        %v2646 = vld [vmem:[#allocation7 + $0x98] sm:$0xff]
        %v2647 = vld [vmem:[#allocation7 + $0xa0] sm:$0xff]
        %v2648 = vld [vmem:[#allocation7 + $0xa8] sm:$0xff]
        %v2649 = vld [vmem:[#allocation7 + $0xb0] sm:$0xff]
        %v2650 = vld [vmem:[#allocation7 + $0xb8] sm:$0xff]
        %v2651 = vld [vmem:[#allocation7 + $0xc0] sm:$0xff]
        %v2652 = vld [vmem:[#allocation7 + $0xc8] sm:$0xff]
        %v2653 = vld [vmem:[#allocation7 + $0xd0] sm:$0xff]
        %v2654 = vld [vmem:[#allocation7 + $0xd8] sm:$0xff]
        %v2655 = vld [vmem:[#allocation7 + $0xe0] sm:$0xff]
        %v2656 = vld [vmem:[#allocation7 + $0xe8] sm:$0xff]
        %v2657 = vld [vmem:[#allocation7 + $0xf0] sm:$0xff]
        %v2658 = vld [vmem:[#allocation7 + $0xf8] sm:$0xff]
        %v2659 = vld [vmem:[#allocation7 + $0x100] sm:$0xff]
        %v2660 = vld [vmem:[#allocation7 + $0x108] sm:$0xff]
        %v2661 = vld [vmem:[#allocation7 + $0x110] sm:$0xff]
        %v2662 = vld [vmem:[#allocation7 + $0x118] sm:$0xff]
        %v2663 = vld [vmem:[#allocation7 + $0x120] sm:$0xff]
        %v2664 = vld [vmem:[#allocation7 + $0x128] sm:$0xff]
        %v2665 = vld [vmem:[#allocation7 + $0x130] sm:$0xff]
        %v2666 = vld [vmem:[#allocation7 + $0x138] sm:$0xff]
        %v2667 = vld [vmem:[#allocation7 + $0x140] sm:$0xff]
        %v2668 = vld [vmem:[#allocation7 + $0x148] sm:$0xff]
        %v2669 = vld [vmem:[#allocation7 + $0x150] sm:$0xff]
        %v2670 = vld [vmem:[#allocation7 + $0x158] sm:$0xff]
        %v2671 = vld [vmem:[#allocation7 + $0x160] sm:$0xff]
        %v2672 = vld [vmem:[#allocation7 + $0x168] sm:$0xff]
        %v2673 = vld [vmem:[#allocation7 + $0x170] sm:$0xff]
        %v2674 = vld [vmem:[#allocation7 + $0x178] sm:$0xff]
        %v2675 = vld [vmem:[#allocation7 + $0x180] sm:$0xff]
        %v2676 = vld [vmem:[#allocation7 + $0x188] sm:$0xff]
        %v2677 = vld [vmem:[#allocation7 + $0x190] sm:$0xff]
        %v2678 = vld [vmem:[#allocation7 + $0x198] sm:$0xff]
        %v2679 = vld [vmem:[#allocation7 + $0x1a0] sm:$0xff]
        %v2680 = vld [vmem:[#allocation7 + $0x1a8] sm:$0xff]
        %v2681 = vld [vmem:[#allocation7 + $0x1b0] sm:$0xff]
        %v2682 = vld [vmem:[#allocation7 + $0x1b8] sm:$0xff]
        %v2683 = vld [vmem:[#allocation7 + $0x1c0] sm:$0xff]
        %v2684 = vld [vmem:[#allocation7 + $0x1c8] sm:$0xff]
        %v2685 = vld [vmem:[#allocation7 + $0x1d0] sm:$0xff]
        %v2686 = vld [vmem:[#allocation7 + $0x1d8] sm:$0xff]
        %v2687 = vld [vmem:[#allocation7 + $0x1e0] sm:$0xff]
        %v2688 = vld [vmem:[#allocation7 + $0x1e8] sm:$0xff]
        %v2689 = vld [vmem:[#allocation7 + $0x1f0] sm:$0xff]
        %v2690 = vld [vmem:[#allocation7 + $0x1f8] sm:$0xff]
        %v2691 = vld [vmem:[%s6] sm:$0x3]
        %v2693 = vperm.slane %v2691, 0
        %v2694 = vperm.slane %v2691, 1
        %v2761 = vunpack.c.l.b16 %v2627
        %v2762 = vunpack.c.h.b16 %v2627
        %v2763 = vunpack.c.l.b16 %v2628
        %v2764 = vunpack.c.h.b16 %v2628
        %v2765 = vunpack.c.l.b16 %v2629
        %v2766 = vunpack.c.h.b16 %v2629
        %v2767 = vunpack.c.l.b16 %v2630
        %v2768 = vunpack.c.h.b16 %v2630
        %v2769 = vunpack.c.l.b16 %v2631
        %v2770 = vunpack.c.h.b16 %v2631
        %v2771 = vunpack.c.l.b16 %v2632
        %v2772 = vunpack.c.h.b16 %v2632
        %v2773 = vunpack.c.l.b16 %v2633
        %v2774 = vunpack.c.h.b16 %v2633
        %v2775 = vunpack.c.l.b16 %v2634
        %v2776 = vunpack.c.h.b16 %v2634
        %v2777 = vunpack.c.l.b16 %v2635
        %v2778 = vunpack.c.h.b16 %v2635
        %v2779 = vunpack.c.l.b16 %v2636
        %v2780 = vunpack.c.h.b16 %v2636
        %v2781 = vunpack.c.l.b16 %v2637
        %v2782 = vunpack.c.h.b16 %v2637
        %v2783 = vunpack.c.l.b16 %v2638
        %v2784 = vunpack.c.h.b16 %v2638
        %v2785 = vunpack.c.l.b16 %v2639
        %v2786 = vunpack.c.h.b16 %v2639
        %v2787 = vunpack.c.l.b16 %v2640
        %v2788 = vunpack.c.h.b16 %v2640
        %v2789 = vunpack.c.l.b16 %v2641
        %v2790 = vunpack.c.h.b16 %v2641
        %v2791 = vunpack.c.l.b16 %v2642
        %v2792 = vunpack.c.h.b16 %v2642
        %v2793 = vunpack.c.l.b16 %v2643
        %v2794 = vunpack.c.h.b16 %v2643
        %v2795 = vunpack.c.l.b16 %v2644
        %v2796 = vunpack.c.h.b16 %v2644
        %v2797 = vunpack.c.l.b16 %v2645
        %v2798 = vunpack.c.h.b16 %v2645
        %v2799 = vunpack.c.l.b16 %v2646
        %v2800 = vunpack.c.h.b16 %v2646
        %v2801 = vunpack.c.l.b16 %v2647
        %v2802 = vunpack.c.h.b16 %v2647
        %v2803 = vunpack.c.l.b16 %v2648
        %v2804 = vunpack.c.h.b16 %v2648
        %v2805 = vunpack.c.l.b16 %v2649
        %v2806 = vunpack.c.h.b16 %v2649
        %v2807 = vunpack.c.l.b16 %v2650
        %v2808 = vunpack.c.h.b16 %v2650
        %v2809 = vunpack.c.l.b16 %v2651
        %v2810 = vunpack.c.h.b16 %v2651
        %v2811 = vunpack.c.l.b16 %v2652
        %v2812 = vunpack.c.h.b16 %v2652
        %v2813 = vunpack.c.l.b16 %v2653
        %v2814 = vunpack.c.h.b16 %v2653
        %v2815 = vunpack.c.l.b16 %v2654
        %v2816 = vunpack.c.h.b16 %v2654
        %v2817 = vunpack.c.l.b16 %v2655
        %v2818 = vunpack.c.h.b16 %v2655
        %v2819 = vunpack.c.l.b16 %v2656
        %v2820 = vunpack.c.h.b16 %v2656
        %v2821 = vunpack.c.l.b16 %v2657
        %v2822 = vunpack.c.h.b16 %v2657
        %v2823 = vunpack.c.l.b16 %v2658
        %v2824 = vunpack.c.h.b16 %v2658
        %v2825 = vunpack.c.l.b16 %v2659
        %v2826 = vunpack.c.h.b16 %v2659
        %v2827 = vunpack.c.l.b16 %v2660
        %v2828 = vunpack.c.h.b16 %v2660
        %v2829 = vunpack.c.l.b16 %v2661
        %v2830 = vunpack.c.h.b16 %v2661
        %v2831 = vunpack.c.l.b16 %v2662
        %v2832 = vunpack.c.h.b16 %v2662
        %v2833 = vunpack.c.l.b16 %v2663
        %v2834 = vunpack.c.h.b16 %v2663
        %v2835 = vunpack.c.l.b16 %v2664
        %v2836 = vunpack.c.h.b16 %v2664
        %v2837 = vunpack.c.l.b16 %v2665
        %v2838 = vunpack.c.h.b16 %v2665
        %v2839 = vunpack.c.l.b16 %v2666
        %v2840 = vunpack.c.h.b16 %v2666
        %v2841 = vunpack.c.l.b16 %v2667
        %v2842 = vunpack.c.h.b16 %v2667
        %v2843 = vunpack.c.l.b16 %v2668
        %v2844 = vunpack.c.h.b16 %v2668
        %v2845 = vunpack.c.l.b16 %v2669
        %v2846 = vunpack.c.h.b16 %v2669
        %v2847 = vunpack.c.l.b16 %v2670
        %v2848 = vunpack.c.h.b16 %v2670
        %v2849 = vunpack.c.l.b16 %v2671
        %v2850 = vunpack.c.h.b16 %v2671
        %v2851 = vunpack.c.l.b16 %v2672
        %v2852 = vunpack.c.h.b16 %v2672
        %v2853 = vunpack.c.l.b16 %v2673
        %v2854 = vunpack.c.h.b16 %v2673
        %v2855 = vunpack.c.l.b16 %v2674
        %v2856 = vunpack.c.h.b16 %v2674
        %v2857 = vunpack.c.l.b16 %v2675
        %v2858 = vunpack.c.h.b16 %v2675
        %v2859 = vunpack.c.l.b16 %v2676
        %v2860 = vunpack.c.h.b16 %v2676
        %v2861 = vunpack.c.l.b16 %v2677
        %v2862 = vunpack.c.h.b16 %v2677
        %v2863 = vunpack.c.l.b16 %v2678
        %v2864 = vunpack.c.h.b16 %v2678
        %v2865 = vunpack.c.l.b16 %v2679
        %v2866 = vunpack.c.h.b16 %v2679
        %v2867 = vunpack.c.l.b16 %v2680
        %v2868 = vunpack.c.h.b16 %v2680
        %v2869 = vunpack.c.l.b16 %v2681
        %v2870 = vunpack.c.h.b16 %v2681
        %v2871 = vunpack.c.l.b16 %v2682
        %v2872 = vunpack.c.h.b16 %v2682
        %v2873 = vunpack.c.l.b16 %v2683
        %v2874 = vunpack.c.h.b16 %v2683
        %v2875 = vunpack.c.l.b16 %v2684
        %v2876 = vunpack.c.h.b16 %v2684
        %v2877 = vunpack.c.l.b16 %v2685
        %v2878 = vunpack.c.h.b16 %v2685
        %v2879 = vunpack.c.l.b16 %v2686
        %v2880 = vunpack.c.h.b16 %v2686
        %v2881 = vunpack.c.l.b16 %v2687
        %v2882 = vunpack.c.h.b16 %v2687
        %v2883 = vunpack.c.l.b16 %v2688
        %v2884 = vunpack.c.h.b16 %v2688
        %v2885 = vunpack.c.l.b16 %v2689
        %v2886 = vunpack.c.h.b16 %v2689
        %v2887 = vunpack.c.l.b16 %v2690
        %v2888 = vunpack.c.h.b16 %v2690
        %v2889 = vpack.c.b16 %v2763, %v2761
        %v2890 = vpack.c.b16 %v2764, %v2762
        %v2891 = vpack.c.b16 %v2767, %v2765
        %v2892 = vpack.c.b16 %v2768, %v2766
        %v2893 = vpack.c.b16 %v2771, %v2769
        %v2894 = vpack.c.b16 %v2772, %v2770
        %v2895 = vpack.c.b16 %v2775, %v2773
        %v2896 = vpack.c.b16 %v2776, %v2774
        %v2897 = vpack.c.b16 %v2779, %v2777
        %v2898 = vpack.c.b16 %v2780, %v2778
        %v2899 = vpack.c.b16 %v2783, %v2781
        %v2900 = vpack.c.b16 %v2784, %v2782
        %v2901 = vpack.c.b16 %v2787, %v2785
        %v2902 = vpack.c.b16 %v2788, %v2786
        %v2903 = vpack.c.b16 %v2791, %v2789
        %v2904 = vpack.c.b16 %v2792, %v2790
        %v2905 = vpack.c.b16 %v2795, %v2793
        %v2906 = vpack.c.b16 %v2796, %v2794
        %v2907 = vpack.c.b16 %v2799, %v2797
        %v2908 = vpack.c.b16 %v2800, %v2798
        %v2909 = vpack.c.b16 %v2803, %v2801
        %v2910 = vpack.c.b16 %v2804, %v2802
        %v2911 = vpack.c.b16 %v2807, %v2805
        %v2912 = vpack.c.b16 %v2808, %v2806
        %v2913 = vpack.c.b16 %v2811, %v2809
        %v2914 = vpack.c.b16 %v2812, %v2810
        %v2915 = vpack.c.b16 %v2815, %v2813
        %v2916 = vpack.c.b16 %v2816, %v2814
        %v2917 = vpack.c.b16 %v2819, %v2817
        %v2918 = vpack.c.b16 %v2820, %v2818
        %v2919 = vpack.c.b16 %v2823, %v2821
        %v2920 = vpack.c.b16 %v2824, %v2822
        %v2921 = vpack.c.b16 %v2827, %v2825
        %v2922 = vpack.c.b16 %v2828, %v2826
        %v2923 = vpack.c.b16 %v2831, %v2829
        %v2924 = vpack.c.b16 %v2832, %v2830
        %v2925 = vpack.c.b16 %v2835, %v2833
        %v2926 = vpack.c.b16 %v2836, %v2834
        %v2927 = vpack.c.b16 %v2839, %v2837
        %v2928 = vpack.c.b16 %v2840, %v2838
        %v2929 = vpack.c.b16 %v2843, %v2841
        %v2930 = vpack.c.b16 %v2844, %v2842
        %v2931 = vpack.c.b16 %v2847, %v2845
        %v2932 = vpack.c.b16 %v2848, %v2846
        %v2933 = vpack.c.b16 %v2851, %v2849
        %v2934 = vpack.c.b16 %v2852, %v2850
        %v2935 = vpack.c.b16 %v2855, %v2853
        %v2936 = vpack.c.b16 %v2856, %v2854
        %v2937 = vpack.c.b16 %v2859, %v2857
        %v2938 = vpack.c.b16 %v2860, %v2858
        %v2939 = vpack.c.b16 %v2863, %v2861
        %v2940 = vpack.c.b16 %v2864, %v2862
        %v2941 = vpack.c.b16 %v2867, %v2865
        %v2942 = vpack.c.b16 %v2868, %v2866
        %v2943 = vpack.c.b16 %v2871, %v2869
        %v2944 = vpack.c.b16 %v2872, %v2870
        %v2945 = vpack.c.b16 %v2875, %v2873
        %v2946 = vpack.c.b16 %v2876, %v2874
        %v2947 = vpack.c.b16 %v2879, %v2877
        %v2948 = vpack.c.b16 %v2880, %v2878
        %v2949 = vpack.c.b16 %v2883, %v2881
        %v2950 = vpack.c.b16 %v2884, %v2882
        %v2951 = vpack.c.b16 %v2887, %v2885
        %v2952 = vpack.c.b16 %v2888, %v2886
        %3017 = vmatpush.bf16.msra.mxu0 %v2903
        %3018 = vmatpush.bf16.msra.mxu0 %v2901
        %3019 = vmatpush.bf16.msra.mxu0 %v2899
        %3020 = vmatpush.bf16.msra.mxu0 %v2897
        %3021 = vmatpush.bf16.msra.mxu0 %v2895
        %3022 = vmatpush.bf16.msra.mxu0 %v2893
        %3023 = vmatpush.bf16.msra.mxu0 %v2891
        %3024 = vmatpush.bf16.msra.mxu0 %v2889
        %3025 = vmatmul.bf16.gmra.mxu0 %v2623
        %v3026 = vpop.f32.mrf.mxu0
        %v3027 = vadd.f32 %v2693, %v3026
        %v3028 = vpop.f32.mrf.mxu0
        %3029 = vdwg.mxu0
        %3030 = vmatpush.bf16.msra.mxu0 %v2919
        %3031 = vmatpush.bf16.msra.mxu0 %v2917
        %3032 = vmatpush.bf16.msra.mxu0 %v2915
        %3033 = vmatpush.bf16.msra.mxu0 %v2913
        %3034 = vmatpush.bf16.msra.mxu0 %v2911
        %3035 = vmatpush.bf16.msra.mxu0 %v2909
        %3036 = vmatpush.bf16.msra.mxu0 %v2907
        %3037 = vmatpush.bf16.msra.mxu0 %v2905
        %3038 = vmatmul.bf16.gmra.mxu0 %v2624
        %v3039 = vpop.f32.mrf.mxu0
        %v3040 = vadd.f32 %v3027, %v3039
        %v3041 = vpop.f32.mrf.mxu0
        %3042 = vdwg.mxu0
        %3043 = vmatpush.bf16.msra.mxu0 %v2935
        %3044 = vmatpush.bf16.msra.mxu0 %v2933
        %3045 = vmatpush.bf16.msra.mxu0 %v2931
        %3046 = vmatpush.bf16.msra.mxu0 %v2929
        %3047 = vmatpush.bf16.msra.mxu0 %v2927
        %3048 = vmatpush.bf16.msra.mxu0 %v2925
        %3049 = vmatpush.bf16.msra.mxu0 %v2923
        %3050 = vmatpush.bf16.msra.mxu0 %v2921
        %3051 = vmatmul.bf16.gmra.mxu0 %v2625
        %v3052 = vpop.f32.mrf.mxu0
        %v3053 = vadd.f32 %v3040, %v3052
        %v3054 = vpop.f32.mrf.mxu0
        %3055 = vdwg.mxu0
        %3056 = vmatpush.bf16.msra.mxu0 %v2951
        %3057 = vmatpush.bf16.msra.mxu0 %v2949
        %3058 = vmatpush.bf16.msra.mxu0 %v2947
        %3059 = vmatpush.bf16.msra.mxu0 %v2945
        %3060 = vmatpush.bf16.msra.mxu0 %v2943
        %3061 = vmatpush.bf16.msra.mxu0 %v2941
        %3062 = vmatpush.bf16.msra.mxu0 %v2939
        %3063 = vmatpush.bf16.msra.mxu0 %v2937
        %3064 = vmatmul.bf16.gmra.mxu0 %v2626
        %v3065 = vpop.f32.mrf.mxu0
        %v3066 = vadd.f32 %v3053, %v3065
        %v3067 = vpop.f32.mrf.mxu0
        %3068 = vdwg.mxu0
        %3069 = vmatpush.bf16.msra.mxu0 %v2904
        %3070 = vmatpush.bf16.msra.mxu0 %v2902
        %3071 = vmatpush.bf16.msra.mxu0 %v2900
        %3072 = vmatpush.bf16.msra.mxu0 %v2898
        %3073 = vmatpush.bf16.msra.mxu0 %v2896
        %3074 = vmatpush.bf16.msra.mxu0 %v2894
        %3075 = vmatpush.bf16.msra.mxu0 %v2892
        %3076 = vmatpush.bf16.msra.mxu0 %v2890
        %3077 = vmatmul.bf16.gmra.mxu0 %v2623
        %v3078 = vpop.f32.mrf.mxu0
        %v3079 = vadd.f32 %v2694, %v3078
        %v3080 = vpop.f32.mrf.mxu0
        %3081 = vdwg.mxu0
        %3082 = vmatpush.bf16.msra.mxu0 %v2920
        %3083 = vmatpush.bf16.msra.mxu0 %v2918
        %3084 = vmatpush.bf16.msra.mxu0 %v2916
        %3085 = vmatpush.bf16.msra.mxu0 %v2914
        %3086 = vmatpush.bf16.msra.mxu0 %v2912
        %3087 = vmatpush.bf16.msra.mxu0 %v2910
        %3088 = vmatpush.bf16.msra.mxu0 %v2908
        %3089 = vmatpush.bf16.msra.mxu0 %v2906
        %3090 = vmatmul.bf16.gmra.mxu0 %v2624
        %v3091 = vpop.f32.mrf.mxu0
        %v3092 = vadd.f32 %v3079, %v3091
        %v3093 = vpop.f32.mrf.mxu0
        %3094 = vdwg.mxu0
        %3095 = vmatpush.bf16.msra.mxu0 %v2936
        %3096 = vmatpush.bf16.msra.mxu0 %v2934
        %3097 = vmatpush.bf16.msra.mxu0 %v2932
        %3098 = vmatpush.bf16.msra.mxu0 %v2930
        %3099 = vmatpush.bf16.msra.mxu0 %v2928
        %3100 = vmatpush.bf16.msra.mxu0 %v2926
        %3101 = vmatpush.bf16.msra.mxu0 %v2924
        %3102 = vmatpush.bf16.msra.mxu0 %v2922
        %3103 = vmatmul.bf16.gmra.mxu0 %v2625
        %v3104 = vpop.f32.mrf.mxu0
        %v3105 = vadd.f32 %v3092, %v3104
        %v3106 = vpop.f32.mrf.mxu0
        %3107 = vdwg.mxu0
        %3108 = vmatpush.bf16.msra.mxu0 %v2952
        %3109 = vmatpush.bf16.msra.mxu0 %v2950
        %3110 = vmatpush.bf16.msra.mxu0 %v2948
        %3111 = vmatpush.bf16.msra.mxu0 %v2946
        %3112 = vmatpush.bf16.msra.mxu0 %v2944
        %3113 = vmatpush.bf16.msra.mxu0 %v2942
        %3114 = vmatpush.bf16.msra.mxu0 %v2940
        %3115 = vmatpush.bf16.msra.mxu0 %v2938
        %3116 = vmatmul.bf16.gmra.mxu0 %v2626
        %v3117 = vpop.f32.mrf.mxu0
        %v3118 = vadd.f32 %v3105, %v3117
        %v3119 = vpop.f32.mrf.mxu0
        %3120 = vdwg.mxu0
        %v3121 = vmax.f32 %v3066, 0.0
        %v3122 = vmax.f32 %v3118, 0.0
        %v3123 = vpack.c.bf16 %v3121, %v3121
        %v3124 = vpack.c.bf16 %v3122, %v3122
        %v3125 = vld [vmem:[#allocation8] sm:$0xf]
        %v3126 = vld [vmem:[#allocation8 + $0x4] sm:$0xf]
        %v3127 = vld [vmem:[#allocation8 + $0x8] sm:$0xf]
        %v3128 = vld [vmem:[#allocation8 + $0xc] sm:$0xf]
        %v3129 = vld [vmem:[#allocation8 + $0x10] sm:$0xf]
        %v3130 = vld [vmem:[#allocation8 + $0x14] sm:$0xf]
        %v3131 = vld [vmem:[#allocation8 + $0x18] sm:$0xf]
        %v3132 = vld [vmem:[#allocation8 + $0x1c] sm:$0xf]
        %v3133 = vld [vmem:[#allocation8 + $0x20] sm:$0xf]
        %v3134 = vld [vmem:[#allocation8 + $0x24] sm:$0xf]
        %v3135 = vld [vmem:[#allocation8 + $0x28] sm:$0xf]
        %v3136 = vld [vmem:[#allocation8 + $0x2c] sm:$0xf]
        %v3137 = vld [vmem:[#allocation8 + $0x30] sm:$0xf]
        %v3138 = vld [vmem:[#allocation8 + $0x34] sm:$0xf]
        %v3139 = vld [vmem:[#allocation8 + $0x38] sm:$0xf]
        %v3140 = vld [vmem:[#allocation8 + $0x3c] sm:$0xf]
        %v3141 = vld [vmem:[#allocation8 + $0x40] sm:$0xf]
        %v3142 = vld [vmem:[#allocation8 + $0x44] sm:$0xf]
        %v3143 = vld [vmem:[#allocation8 + $0x48] sm:$0xf]
        %v3144 = vld [vmem:[#allocation8 + $0x4c] sm:$0xf]
        %v3145 = vld [vmem:[#allocation8 + $0x50] sm:$0xf]
        %v3146 = vld [vmem:[#allocation8 + $0x54] sm:$0xf]
        %v3147 = vld [vmem:[#allocation8 + $0x58] sm:$0xf]
        %v3148 = vld [vmem:[#allocation8 + $0x5c] sm:$0xf]
        %v3149 = vld [vmem:[#allocation8 + $0x60] sm:$0xf]
        %v3150 = vld [vmem:[#allocation8 + $0x64] sm:$0xf]
        %v3151 = vld [vmem:[#allocation8 + $0x68] sm:$0xf]
        %v3152 = vld [vmem:[#allocation8 + $0x6c] sm:$0xf]
        %v3153 = vld [vmem:[#allocation8 + $0x70] sm:$0xf]
        %v3154 = vld [vmem:[#allocation8 + $0x74] sm:$0xf]
        %v3155 = vld [vmem:[#allocation8 + $0x78] sm:$0xf]
        %v3156 = vld [vmem:[#allocation8 + $0x7c] sm:$0xf]
        %v3157 = vld [vmem:[%s8] sm:$0x1]
        %v3159 = vperm.slane %v3157, 0
        %v3193 = vunpack.c.l.b16 %v3125
        %v3194 = vunpack.c.l.b16 %v3126
        %v3195 = vunpack.c.l.b16 %v3127
        %v3196 = vunpack.c.l.b16 %v3128
        %v3197 = vunpack.c.l.b16 %v3129
        %v3198 = vunpack.c.l.b16 %v3130
        %v3199 = vunpack.c.l.b16 %v3131
        %v3200 = vunpack.c.l.b16 %v3132
        %v3201 = vunpack.c.l.b16 %v3133
        %v3202 = vunpack.c.l.b16 %v3134
        %v3203 = vunpack.c.l.b16 %v3135
        %v3204 = vunpack.c.l.b16 %v3136
        %v3205 = vunpack.c.l.b16 %v3137
        %v3206 = vunpack.c.l.b16 %v3138
        %v3207 = vunpack.c.l.b16 %v3139
        %v3208 = vunpack.c.l.b16 %v3140
        %v3209 = vunpack.c.l.b16 %v3141
        %v3210 = vunpack.c.l.b16 %v3142
        %v3211 = vunpack.c.l.b16 %v3143
        %v3212 = vunpack.c.l.b16 %v3144
        %v3213 = vunpack.c.l.b16 %v3145
        %v3214 = vunpack.c.l.b16 %v3146
        %v3215 = vunpack.c.l.b16 %v3147
        %v3216 = vunpack.c.l.b16 %v3148
        %v3217 = vunpack.c.l.b16 %v3149
        %v3218 = vunpack.c.l.b16 %v3150
        %v3219 = vunpack.c.l.b16 %v3151
        %v3220 = vunpack.c.l.b16 %v3152
        %v3221 = vunpack.c.l.b16 %v3153
        %v3222 = vunpack.c.l.b16 %v3154
        %v3223 = vunpack.c.l.b16 %v3155
        %v3224 = vunpack.c.l.b16 %v3156
        %v3225 = vpack.c.b16 %v3194, %v3193
        %v3226 = vpack.c.b16 %v3196, %v3195
        %v3227 = vpack.c.b16 %v3198, %v3197
        %v3228 = vpack.c.b16 %v3200, %v3199
        %v3229 = vpack.c.b16 %v3202, %v3201
        %v3230 = vpack.c.b16 %v3204, %v3203
        %v3231 = vpack.c.b16 %v3206, %v3205
        %v3232 = vpack.c.b16 %v3208, %v3207
        %v3233 = vpack.c.b16 %v3210, %v3209
        %v3234 = vpack.c.b16 %v3212, %v3211
        %v3235 = vpack.c.b16 %v3214, %v3213
        %v3236 = vpack.c.b16 %v3216, %v3215
        %v3237 = vpack.c.b16 %v3218, %v3217
        %v3238 = vpack.c.b16 %v3220, %v3219
        %v3239 = vpack.c.b16 %v3222, %v3221
        %v3240 = vpack.c.b16 %v3224, %v3223
        %3257 = vmatpush.bf16.msra.mxu0 %v3232
        %3258 = vmatpush.bf16.msra.mxu0 %v3231
        %3259 = vmatpush.bf16.msra.mxu0 %v3230
        %3260 = vmatpush.bf16.msra.mxu0 %v3229
        %3261 = vmatpush.bf16.msra.mxu0 %v3228
        %3262 = vmatpush.bf16.msra.mxu0 %v3227
        %3263 = vmatpush.bf16.msra.mxu0 %v3226
        %3264 = vmatpush.bf16.msra.mxu0 %v3225
        %3265 = vmatmul.bf16.gmra.mxu0 %v3123
        %v3266 = vpop.f32.mrf.mxu0
        %v3267 = vadd.f32 %v3159, %v3266
        %v3268 = vpop.f32.mrf.mxu0
        %3269 = vdwg.mxu0
        %3270 = vmatpush.bf16.msra.mxu0 %v3240
        %3271 = vmatpush.bf16.msra.mxu0 %v3239
        %3272 = vmatpush.bf16.msra.mxu0 %v3238
        %3273 = vmatpush.bf16.msra.mxu0 %v3237
        %3274 = vmatpush.bf16.msra.mxu0 %v3236
        %3275 = vmatpush.bf16.msra.mxu0 %v3235
        %3276 = vmatpush.bf16.msra.mxu0 %v3234
        %3277 = vmatpush.bf16.msra.mxu0 %v3233
        %3278 = vmatmul.bf16.gmra.mxu0 %v3124
        %v3279 = vpop.f32.mrf.mxu0
        %v3280 = vadd.f32 %v3267, %v3279
        %v3281 = vpop.f32.mrf.mxu0
        %3282 = vdwg.mxu0
        %v3283 = vmax.f32 %v3280, 0.0
        %v3284 = vpack.c.bf16 %v3283, %v3283
        %v3285 = vld [vmem:[#allocation10] sm:$0xf]
        %v3286 = vld [vmem:[#allocation10 + $0x4] sm:$0xf]
        %v3287 = vld [vmem:[#allocation10 + $0x8] sm:$0xf]
        %v3288 = vld [vmem:[#allocation10 + $0xc] sm:$0xf]
        %v3289 = vld [vmem:[#allocation10 + $0x10] sm:$0xf]
        %v3290 = vld [vmem:[#allocation10 + $0x14] sm:$0xf]
        %v3291 = vld [vmem:[#allocation10 + $0x18] sm:$0xf]
        %v3292 = vld [vmem:[#allocation10 + $0x1c] sm:$0xf]
        %v3293 = vld [vmem:[#allocation10 + $0x20] sm:$0xf]
        %v3294 = vld [vmem:[#allocation10 + $0x24] sm:$0xf]
        %v3295 = vld [vmem:[#allocation10 + $0x28] sm:$0xf]
        %v3296 = vld [vmem:[#allocation10 + $0x2c] sm:$0xf]
        %v3297 = vld [vmem:[#allocation10 + $0x30] sm:$0xf]
        %v3298 = vld [vmem:[#allocation10 + $0x34] sm:$0xf]
        %v3299 = vld [vmem:[#allocation10 + $0x38] sm:$0xf]
        %v3300 = vld [vmem:[#allocation10 + $0x3c] sm:$0xf]
        %v3301 = vld [vmem:[%s10] sm:$0x1]
        %v3303 = vperm.slane %v3301, 0
        %v3321 = vunpack.c.l.b16 %v3285
        %v3322 = vunpack.c.l.b16 %v3286
        %v3323 = vunpack.c.l.b16 %v3287
        %v3324 = vunpack.c.l.b16 %v3288
        %v3325 = vunpack.c.l.b16 %v3289
        %v3326 = vunpack.c.l.b16 %v3290
        %v3327 = vunpack.c.l.b16 %v3291
        %v3328 = vunpack.c.l.b16 %v3292
        %v3329 = vunpack.c.l.b16 %v3293
        %v3330 = vunpack.c.l.b16 %v3294
        %v3331 = vunpack.c.l.b16 %v3295
        %v3332 = vunpack.c.l.b16 %v3296
        %v3333 = vunpack.c.l.b16 %v3297
        %v3334 = vunpack.c.l.b16 %v3298
        %v3335 = vunpack.c.l.b16 %v3299
        %v3336 = vunpack.c.l.b16 %v3300
        %v3337 = vpack.c.b16 %v3322, %v3321
        %v3338 = vpack.c.b16 %v3324, %v3323
        %v3339 = vpack.c.b16 %v3326, %v3325
        %v3340 = vpack.c.b16 %v3328, %v3327
        %v3341 = vpack.c.b16 %v3330, %v3329
        %v3342 = vpack.c.b16 %v3332, %v3331
        %v3343 = vpack.c.b16 %v3334, %v3333
        %v3344 = vpack.c.b16 %v3336, %v3335
        %3353 = vmatpush.bf16.msra.mxu0 %v3344
        %3354 = vmatpush.bf16.msra.mxu0 %v3343
        %3355 = vmatpush.bf16.msra.mxu0 %v3342
        %3356 = vmatpush.bf16.msra.mxu0 %v3341
        %3357 = vmatpush.bf16.msra.mxu0 %v3340
        %3358 = vmatpush.bf16.msra.mxu0 %v3339
        %3359 = vmatpush.bf16.msra.mxu0 %v3338
        %3360 = vmatpush.bf16.msra.mxu0 %v3337
        %3361 = vmatmul.bf16.gmra.mxu0 %v3284
        %v3362 = vpop.f32.mrf.mxu0
        %v3363 = vadd.f32 %v3303, %v3362
        %v3364 = vpop.f32.mrf.mxu0
        %3365 = vdwg.mxu0
        %3366 = vst [vmem:[%s458] sm:$0xff] %v3363
        %s3367 = sand.u32 %s272, 1
        %s3368 = scalar_lea.sflag [#allocation4], %s3367
        %s3369 = sand.u32 %s272, 1
        %s3370 = smul.addr %s3369, 8
        %s3371 = scalar_lea.vmem [#allocation11], %s3370
        // Predicated region
        $region85: #{tpu_custom_call.1} parent=63 // pred_check
          %p3372 = pneg %p282
        $region86: #{tpu_custom_call.1} parent=63 // pred_check_branch
          %3374 = sbr.rel (%p3372) target = $region88
        $region87: #{tpu_custom_call.1} parent=63 // pred_region
          %3376 = vsyncadd %s3368, 0
          %s3377 = smul.addr %s28, 8
          %s3378 = scalar_lea.hbm %s11, %s3377
          %s3380 = sshll.u32 %s3371, 4
          %s3381 = int_to_ptr.vmem [resolvable:$true] %s3380
          %s3382 = sshll.u32 %s3378, 4
          %s3383 = int_to_ptr.hbm [resolvable:$true] %s3382
          %3385 = dma.vmem_to_hbm [thread:$0]  %s3381, 128, %s3383, %s3368
        $region88: #{tpu_custom_call.1} parent=63 // pred_fallthru
          _
      $region64: #{tpu_custom_call.1} parent=5 // pred_fallthru
        _
      %p3386 = scmp.le.s32.totalorder 2, %s23
      // Predicated region
      $region89: #{tpu_custom_call.1} parent=5 // pred_check
        %p3387 = pneg %p3386
      $region90: #{tpu_custom_call.1} parent=5 // pred_check_branch
        %3389 = sbr.rel (%p3387) target = $region92
      $region91: #{tpu_custom_call.1} parent=5 // pred_region
        %s3390 = ssub.s32 %s23, 2
        // Predicated region
        $region93: #{tpu_custom_call.1} parent=91 // pred_check
          %p3391 = pneg %p288
        $region94: #{tpu_custom_call.1} parent=91 // pred_check_branch
          %3393 = sbr.rel (%p3391) target = $region96
        $region95: #{tpu_custom_call.1} parent=91 // pred_region
          %s3394 = sand.u32 %s273, 1
          %s3395 = scalar_lea.sflag [#allocation4], %s3394
          %s3396 = sand.u32 %s273, 1
          %s3397 = smul.addr %s3396, 8
          %s3398 = scalar_lea.vmem [#allocation11], %s3397
          %3400 = dma.done %s3395, 128
        $region96: #{tpu_custom_call.1} parent=91 // pred_fallthru
          _
      $region92: #{tpu_custom_call.1} parent=5 // pred_fallthru
        _
    $region6: #{tpu_custom_call.1} parent=1 // loop_footer
      %s27 = sadd.s32 1, %s23
    $region7: #{tpu_custom_call.1} parent=1 // loop_footer_branch
      %22 = sbr.rel target = $region3
    $region8: #{tpu_custom_call.1} parent=1 // loop_exit
      _
    %3401 = vsyncpa [#allocation3], 1
    %s3402 = scalar_lea.sflag [#allocation3], 1
    %3403 = vsyncpa %s3402, 1
    %3404 = vsyncpa [#allocation6], 1
    %3405 = vsyncpa [#allocation9], 1
    %3406 = vsyncpa [#allocation4], 1
    %s3407 = scalar_lea.sflag [#allocation4], 1
    %3408 = vsyncpa %s3407, 1

</llo_original>
